<compile_context>
chip_gen: v6e
topology: v6e:2x2x1
jax: 0.10.0
libtpu: 0.0.40
codegen_flags: <defaults>
</compile_context>

<pallas_src>
import jax
import jax.numpy as jnp
from jax.experimental import pallas as pl
from jax.experimental.pallas import tpu as pltpu

BN_EPS = 1e-5
LANE = 128          # pad all feature / assign / class dims to the 128-lane vreg width
NEG_INF = -1e30     # softmax-bias padding so padded assign columns get exactly 0 weight


# ----------------------------------------------------------------------------- packing layout

def _layout(n_layers):
    """Static index layout of the packed weight / bias stacks."""
    idx = {
        "emb": 0,
        "layer": [1 + li for li in range(n_layers)],
        "wa": 1 + n_layers,
        "fc": [2 + n_layers + k for k in range(3)],
    }
    n_w = n_layers + 5
    return idx, n_w


def _pad2(x, rows, cols, fill=0.0):
    x = jnp.asarray(x, jnp.float32)
    return jnp.pad(x, ((0, rows - x.shape[0]), (0, cols - x.shape[1])),
                   constant_values=fill)


def _fold_bn(lp):
    # eval-mode BatchNorm folded into the preceding Linear
    scale = lp["gamma"] * jax.lax.rsqrt(lp["var"] + BN_EPS)      # (1, dout)
    w = lp["w"] * scale
    b = (lp["b"] - lp["mean"]) * scale + lp["beta"]
    return w, b


# ----------------------------------------------------------------------------- one-time prep

def prepare_params(params, *, residual=True, matmul_dtype=jnp.bfloat16):
    """Pad to 128 lanes, fold BN, cast weights to matmul dtype and pack into
    one weight stack + one bias stack. Done ONCE at parameter-load time."""
    n_layers = len(params["layers"])
    idx, n_w = _layout(n_layers)
    w_stack = [None] * n_w
    b_stack = [None] * n_w

    def put(i, w, b, bias_fill=0.0):
        w_stack[i] = _pad2(w, LANE, LANE)
        b_stack[i] = _pad2(b, 1, LANE, fill=bias_fill)

    put(idx["emb"], params["emb_w"], params["emb_b"])

    residual_flags = []
    for li, lp in enumerate(params["layers"]):
        w, b = _fold_bn(lp)
        residual_flags.append(bool(residual) and (w.shape[0] == w.shape[1]))
        put(idx["layer"][li], w, b)

    bi = params["layers"][1]   # layer 1 of the stack is the biGCNLayer
    put(idx["wa"], bi["wa"], bi["ba"], bias_fill=NEG_INF)

    for k, name in enumerate(("fc0", "fc1", "fc2")):
        put(idx["fc"][k], params[f"{name}_w"], params[f"{name}_b"])

    assert all(x is not None for x in w_stack)
    w_all = jnp.stack(w_stack, axis=0).astype(matmul_dtype)   # (n_w, 128, 128) bf16
    b_all = jnp.concatenate(b_stack, axis=0)                  # (n_w, 128) f32

    return {
        "w_all": w_all,
        "b_all": b_all,
        "n_layers": n_layers,
        "residual_flags": tuple(residual_flags),
        "n_classes": int(params["fc2_w"].shape[1]),
        "assign_dim": int(bi["wa"].shape[1]),
        "matmul_dtype": matmul_dtype,
    }


def prepare_graph(adj, h, *, matmul_dtype=jnp.bfloat16):
    """Pad node dim to 128 (lane-dense adjacency, MXU-native tiles) and cast
    the 0/1 adjacency + input features to the matmul dtype."""
    n = int(adj.shape[0])
    n_pad = max(LANE, ((n + LANE - 1) // LANE) * LANE)
    adj_p = _pad2(adj, n_pad, n_pad).astype(matmul_dtype)     # 0/1 -> exact in bf16
    h_p = _pad2(h, n_pad, LANE).astype(matmul_dtype)
    return adj_p, h_p, n, n_pad


# ----------------------------------------------------------------------------- fused kernel

def _make_fused_kernel(n_layers, sigma, residual_flags, matmul_dtype,
                       n_real, n_pad, bi_idx=1):
    idx, _ = _layout(n_layers)

    def kernel(adj_ref, h0_ref, w_all_ref, b_all_ref, logits_ref, s_ref):
        def mm(a, b):
            return jnp.dot(a.astype(matmul_dtype), b.astype(matmul_dtype),
                           preferred_element_type=jnp.float32)

        def w(i):
            return w_all_ref[i]                  # (128, 128), already matmul dtype

        def bias(i):
            return b_all_ref[pl.ds(i, 1), :]     # (1, 128) f32

        adj = adj_ref[...]                       # already matmul dtype (cast hoisted to host)

        # Static masks for padded node rows (n_real is a trace-time constant).
        row_ids = jax.lax.broadcasted_iota(jnp.int32, (n_pad, 1), 0)
        node_mask = (row_ids < n_real).astype(jnp.float32)                  # (N_PAD, 1)
        col_ids = jax.lax.broadcasted_iota(jnp.int32, (1, n_pad), 1)
        readout_row = jnp.where(col_ids < n_real, 1.0 / n_real, 0.0)        # (1, N_PAD)

        # embedding_h ; in_feat_dropout is identity in eval mode
        h = mm(h0_ref[...], w(idx["emb"])) + bias(idx["emb"])

        for li in range(n_layers):
            agg = mm(adj, h)                                                # A @ h
            z = mm(agg, w(idx["layer"][li])) + bias(idx["layer"][li])       # Linear + folded BN
            h_gcn = jnp.maximum(z, 0.0)                                     # ReLU
            if residual_flags[li]:
                h_gcn = h_gcn + h
            if li == bi_idx:
                # --- soft assignment branch ---
                logits = mm(agg, w(idx["wa"])) + bias(idx["wa"])
                m = jnp.max(logits, axis=-1, keepdims=True)
                e = jnp.exp(logits - m)
                s = (e / jnp.sum(e, axis=-1, keepdims=True)) * node_mask    # padded rows -> 0
                # coarsen + back-project: s (s^T h_gcn) == (s s^T) h_gcn; contract the
                # assign axis directly (rhs-transpose MXU form, no XLU transpose).
                s_b = s.astype(matmul_dtype)                                # single hoisted cast
                ss = jnp.einsum("nk,mk->nm", s_b, s_b,
                                preferred_element_type=jnp.float32)
                h_back = mm(ss, h_gcn)
                h = sigma * h_back + (1.0 - sigma) * h_gcn
                s_ref[...] = s.astype(s_ref.dtype)
            else:
                h = h_gcn

        # readout == 'mean' as a (1,N_PAD)@(N_PAD,128) matmul: stays on the MXU and
        # zeroes padded node rows; then MLPReadout (L->ReLU->L->ReLU->L).
        hg = mm(readout_row, h)
        y = jnp.maximum(mm(hg, w(idx["fc"][0])) + bias(idx["fc"][0]), 0.0)
        y = jnp.maximum(mm(y, w(idx["fc"][1])) + bias(idx["fc"][1]), 0.0)
        y = mm(y, w(idx["fc"][2])) + bias(idx["fc"][2])
        logits_ref[...] = y.astype(logits_ref.dtype)

    return kernel


# ----------------------------------------------------------------------------- forward wrapper

def bi_gcn_net_forward(adj_p, h_p, prep, sigma, n_real, n_pad):
    """Full biGCNNet forward in one pallas_call. Inputs must come from
    prepare_graph()/prepare_params(). Returns (logits, soft_assign)."""
    n_w = prep["w_all"].shape[0]
    kernel = _make_fused_kernel(
        n_layers=prep["n_layers"], sigma=float(sigma),
        residual_flags=prep["residual_flags"],
        matmul_dtype=prep["matmul_dtype"], n_real=n_real, n_pad=n_pad)

    logits_p, s_p = pl.pallas_call(
        kernel,
        grid=(1,),
        in_specs=[
            pl.BlockSpec((n_pad, n_pad), lambda i: (0, 0)),        # adj (bf16)
            pl.BlockSpec((n_pad, LANE), lambda i: (0, 0)),         # h0  (bf16)
            pl.BlockSpec((n_w, LANE, LANE), lambda i: (0, 0, 0)),  # packed weights
            pl.BlockSpec((n_w, LANE), lambda i: (0, 0)),           # packed biases (f32)
        ],
        out_specs=(pl.BlockSpec((1, LANE), lambda i: (0, 0)),
                   pl.BlockSpec((n_pad, LANE), lambda i: (0, 0))),
        out_shape=(jax.ShapeDtypeStruct((1, LANE), jnp.float32),
                   jax.ShapeDtypeStruct((n_pad, LANE), jnp.float32)),
        compiler_params=pltpu.CompilerParams(
            dimension_semantics=("arbitrary",),
            vmem_limit_bytes=32 * 1024 * 1024),
    )(adj_p, h_p, prep["w_all"], prep["b_all"])

    return logits_p[:, :prep["n_classes"]], s_p[:n_real, :prep["assign_dim"]]


# ----------------------------------------------------------------------------- parameter init

def _init_linear(key, din, dout):
    # PyTorch nn.Linear default init: U(-1/sqrt(fan_in), 1/sqrt(fan_in))
    kw, kb = jax.random.split(key)
    lim = 1.0 / jnp.sqrt(float(din))
    w = jax.random.uniform(kw, (din, dout), jnp.float32, -lim, lim)
    b = jax.random.uniform(kb, (1, dout), jnp.float32, -lim, lim)
    return w, b


def _init_gcn(key, din, dout, assign_dim=None):
    k1, k2 = jax.random.split(key)
    w, b = _init_linear(k1, din, dout)
    p = {
        "w": w, "b": b,
        # BatchNorm1d eval-mode params / running stats
        "gamma": jnp.ones((1, dout), jnp.float32),
        "beta": jnp.zeros((1, dout), jnp.float32),
        "mean": jnp.zeros((1, dout), jnp.float32),
        "var": jnp.ones((1, dout), jnp.float32),
    }
    if assign_dim is not None:
        wa, ba = _init_linear(k2, din, assign_dim)
        p["wa"] = wa
        p["ba"] = ba
    return p


# ----------------------------------------------------------------------------- main

if __name__ == "__main__":
    # net_params (small, consistent with the module)
    N = 16            # number of nodes in the (single) graph
    in_dim = 8
    hidden_dim = 32
    out_dim = 32
    n_classes = 4
    assign_dim = 8
    n_layers = 4      # -> GCN, biGCN, 1x GCN (n_layers-3), GCN(hidden->out)
    sigma = 0.3

    key = jax.random.PRNGKey(0)
    keys = jax.random.split(key, 16)

    # --- inputs ---
    h0 = jax.random.normal(keys[0], (N, in_dim), jnp.float32)
    # dense symmetric 0/1 adjacency with self-loops
    a_rand = jax.random.uniform(keys[1], (N, N))
    adj = (a_rand < 0.25).astype(jnp.float32)
    adj = jnp.maximum(adj, adj.T)
    adj = jnp.maximum(adj, jnp.eye(N, dtype=jnp.float32))

    # --- parameters ---
    emb_w, emb_b = _init_linear(keys[2], in_dim, hidden_dim)
    layers = [
        _init_gcn(keys[3], hidden_dim, hidden_dim),                        # GCNLayer
        _init_gcn(keys[4], hidden_dim, hidden_dim, assign_dim=assign_dim), # biGCNLayer
    ]
    for li in range(n_layers - 3):
        layers.append(_init_gcn(keys[5 + li], hidden_dim, hidden_dim))
    layers.append(_init_gcn(keys[10], hidden_dim, out_dim))                # last GCNLayer

    fc0_w, fc0_b = _init_linear(keys[11], out_dim, out_dim // 2)
    fc1_w, fc1_b = _init_linear(keys[12], out_dim // 2, out_dim // 4)
    fc2_w, fc2_b = _init_linear(keys[13], out_dim // 4, n_classes)

    params = {
        "emb_w": emb_w, "emb_b": emb_b,
        "layers": layers,
        "fc0_w": fc0_w, "fc0_b": fc0_b,
        "fc1_w": fc1_w, "fc1_b": fc1_b,
        "fc2_w": fc2_w, "fc2_b": fc2_b,
    }

    # One-time host-side prep: BN folding, 128-lane padding, bf16 cast, packing.
    # (matmul_dtype=jnp.float32 is available for exact-parity validation.)
    prep = prepare_params(params, residual=True, matmul_dtype=jnp.bfloat16)
    adj_p, h_p, n_real, n_pad = prepare_graph(adj, h0, matmul_dtype=jnp.bfloat16)

    logits, soft_assign = bi_gcn_net_forward(adj_p, h_p, prep, sigma, n_real, n_pad)
    jax.block_until_ready((logits, soft_assign))

    assert logits.shape == (1, n_classes)
    assert soft_assign.shape == (N, assign_dim)
    assert bool(jnp.all(jnp.isfinite(logits))) and bool(jnp.all(jnp.isfinite(soft_assign)))
    print("KERNEL_OK")
</pallas_src>

<mosaic_0001>
module attributes {stable_mosaic.version = 11 : i64} {
  func.func @kernel(%arg0: i32, %arg1: memref<128x128xbf16, #tpu.memory_space<vmem>>, %arg2: memref<128x128xbf16, #tpu.memory_space<vmem>>, %arg3: memref<9x128x128xbf16, #tpu.memory_space<vmem>>, %arg4: memref<9x128xf32, #tpu.memory_space<vmem>>, %arg5: memref<1x128xf32, #tpu.memory_space<vmem>>, %arg6: memref<128x128xf32, #tpu.memory_space<vmem>>) attributes {dimension_semantics = [#tpu.dimension_semantics<arbitrary>], iteration_bounds = array<i64: 1>, scalar_prefetch = 0 : i64, scratch_operands = 0 : i64, tpu.core_type = #tpu.core_type<tc>, window_params = [{pipeline_mode = #tpu.pipeline_mode<synchronous>, transform_indices = @transform_0, window_bounds = array<i64: 128, 128>}, {pipeline_mode = #tpu.pipeline_mode<synchronous>, transform_indices = @transform_1, window_bounds = array<i64: 128, 128>}, {pipeline_mode = #tpu.pipeline_mode<synchronous>, transform_indices = @transform_2, window_bounds = array<i64: 9, 128, 128>}, {pipeline_mode = #tpu.pipeline_mode<synchronous>, transform_indices = @transform_3, window_bounds = array<i64: 9, 128>}, {pipeline_mode = #tpu.pipeline_mode<synchronous>, transform_indices = @transform_4, window_bounds = array<i64: 1, 128>}, {pipeline_mode = #tpu.pipeline_mode<synchronous>, transform_indices = @transform_5, window_bounds = array<i64: 128, 128>}]} {
    %c0 = arith.constant 0 : index
    %c0_0 = arith.constant 0 : index
    %0 = vector.load %arg1[%c0, %c0_0] : memref<128x128xbf16, #tpu.memory_space<vmem>>, vector<128x128xbf16>
    %1 = tpu.iota {dimensions = array<i32: 0>} : vector<128x1xi32>
    %c16_i32 = arith.constant 16 : i32
    %2 = vector.broadcast %c16_i32 : i32 to vector<128x1xi32>
    %3 = arith.cmpi slt, %1, %2 : vector<128x1xi32>
    %4 = arith.extui %3 : vector<128x1xi1> to vector<128x1xi32>
    %5 = arith.sitofp %4 : vector<128x1xi32> to vector<128x1xf32>
    %6 = tpu.iota {dimensions = array<i32: 1>} : vector<1x128xi32>
    %c16_i32_1 = arith.constant 16 : i32
    %7 = vector.broadcast %c16_i32_1 : i32 to vector<1x128xi32>
    %8 = arith.cmpi slt, %6, %7 : vector<1x128xi32>
    %cst = arith.constant 6.250000e-02 : f32
    %cst_2 = arith.constant 0.000000e+00 : f32
    %9 = vector.broadcast %cst : f32 to vector<1x128xf32>
    %10 = vector.broadcast %cst_2 : f32 to vector<1x128xf32>
    %11 = arith.select %8, %9, %10 : vector<1x128xi1>, vector<1x128xf32>
    %c0_3 = arith.constant 0 : index
    %c0_4 = arith.constant 0 : index
    %12 = vector.load %arg2[%c0_3, %c0_4] : memref<128x128xbf16, #tpu.memory_space<vmem>>, vector<128x128xbf16>
    %c0_5 = arith.constant 0 : index
    %c0_6 = arith.constant 0 : index
    %c0_7 = arith.constant 0 : index
    %13 = vector.load %arg3[%c0_5, %c0_6, %c0_7] : memref<9x128x128xbf16, #tpu.memory_space<vmem>>, vector<1x128x128xbf16>
    %14 = vector.shape_cast %13 : vector<1x128x128xbf16> to vector<128x128xbf16>
    %cst_8 = arith.constant dense<0.000000e+00> : vector<128x128xf32>
    %15 = tpu.matmul %12, %14, %cst_8 {dimension_numbers = #tpu.dot_dimension_numbers<[1], [0], [0], [1], [0, 0, 1, 1], [], []>} : vector<128x128xbf16>, vector<128x128xbf16>, vector<128x128xf32> -> vector<128x128xf32>
    %c0_9 = arith.constant 0 : index
    %c0_10 = arith.constant 0 : index
    %16 = vector.load %arg4[%c0_9, %c0_10] : memref<9x128xf32, #tpu.memory_space<vmem>>, vector<1x128xf32>
    %17 = vector.broadcast %16 : vector<1x128xf32> to vector<128x128xf32>
    %18 = arith.addf %15, %17 : vector<128x128xf32>
    %19 = arith.truncf %18 : vector<128x128xf32> to vector<128x128xbf16>
    %cst_11 = arith.constant dense<0.000000e+00> : vector<128x128xf32>
    %20 = tpu.matmul %0, %19, %cst_11 {dimension_numbers = #tpu.dot_dimension_numbers<[1], [0], [0], [1], [0, 0, 1, 1], [], []>} : vector<128x128xbf16>, vector<128x128xbf16>, vector<128x128xf32> -> vector<128x128xf32>
    %c1 = arith.constant 1 : index
    %c0_12 = arith.constant 0 : index
    %c0_13 = arith.constant 0 : index
    %21 = vector.load %arg3[%c1, %c0_12, %c0_13] : memref<9x128x128xbf16, #tpu.memory_space<vmem>>, vector<1x128x128xbf16>
    %22 = vector.shape_cast %21 : vector<1x128x128xbf16> to vector<128x128xbf16>
    %23 = arith.truncf %20 : vector<128x128xf32> to vector<128x128xbf16>
    %cst_14 = arith.constant dense<0.000000e+00> : vector<128x128xf32>
    %24 = tpu.matmul %23, %22, %cst_14 {dimension_numbers = #tpu.dot_dimension_numbers<[1], [0], [0], [1], [0, 0, 1, 1], [], []>} : vector<128x128xbf16>, vector<128x128xbf16>, vector<128x128xf32> -> vector<128x128xf32>
    %c1_15 = arith.constant 1 : index
    %c0_16 = arith.constant 0 : index
    %25 = vector.load %arg4[%c1_15, %c0_16] : memref<9x128xf32, #tpu.memory_space<vmem>>, vector<1x128xf32>
    %26 = vector.broadcast %25 : vector<1x128xf32> to vector<128x128xf32>
    %27 = arith.addf %24, %26 : vector<128x128xf32>
    %cst_17 = arith.constant 0.000000e+00 : f32
    %28 = vector.broadcast %cst_17 : f32 to vector<128x128xf32>
    %29 = arith.maximumf %27, %28 : vector<128x128xf32>
    %30 = arith.addf %29, %18 : vector<128x128xf32>
    %31 = arith.truncf %30 : vector<128x128xf32> to vector<128x128xbf16>
    %cst_18 = arith.constant dense<0.000000e+00> : vector<128x128xf32>
    %32 = tpu.matmul %0, %31, %cst_18 {dimension_numbers = #tpu.dot_dimension_numbers<[1], [0], [0], [1], [0, 0, 1, 1], [], []>} : vector<128x128xbf16>, vector<128x128xbf16>, vector<128x128xf32> -> vector<128x128xf32>
    %c2 = arith.constant 2 : index
    %c0_19 = arith.constant 0 : index
    %c0_20 = arith.constant 0 : index
    %33 = vector.load %arg3[%c2, %c0_19, %c0_20] : memref<9x128x128xbf16, #tpu.memory_space<vmem>>, vector<1x128x128xbf16>
    %34 = vector.shape_cast %33 : vector<1x128x128xbf16> to vector<128x128xbf16>
    %35 = arith.truncf %32 : vector<128x128xf32> to vector<128x128xbf16>
    %cst_21 = arith.constant dense<0.000000e+00> : vector<128x128xf32>
    %36 = tpu.matmul %35, %34, %cst_21 {dimension_numbers = #tpu.dot_dimension_numbers<[1], [0], [0], [1], [0, 0, 1, 1], [], []>} : vector<128x128xbf16>, vector<128x128xbf16>, vector<128x128xf32> -> vector<128x128xf32>
    %c2_22 = arith.constant 2 : index
    %c0_23 = arith.constant 0 : index
    %37 = vector.load %arg4[%c2_22, %c0_23] : memref<9x128xf32, #tpu.memory_space<vmem>>, vector<1x128xf32>
    %38 = vector.broadcast %37 : vector<1x128xf32> to vector<128x128xf32>
    %39 = arith.addf %36, %38 : vector<128x128xf32>
    %cst_24 = arith.constant 0.000000e+00 : f32
    %40 = vector.broadcast %cst_24 : f32 to vector<128x128xf32>
    %41 = arith.maximumf %39, %40 : vector<128x128xf32>
    %42 = arith.addf %41, %30 : vector<128x128xf32>
    %c5 = arith.constant 5 : index
    %c0_25 = arith.constant 0 : index
    %c0_26 = arith.constant 0 : index
    %43 = vector.load %arg3[%c5, %c0_25, %c0_26] : memref<9x128x128xbf16, #tpu.memory_space<vmem>>, vector<1x128x128xbf16>
    %44 = vector.shape_cast %43 : vector<1x128x128xbf16> to vector<128x128xbf16>
    %45 = arith.truncf %32 : vector<128x128xf32> to vector<128x128xbf16>
    %cst_27 = arith.constant dense<0.000000e+00> : vector<128x128xf32>
    %46 = tpu.matmul %45, %44, %cst_27 {dimension_numbers = #tpu.dot_dimension_numbers<[1], [0], [0], [1], [0, 0, 1, 1], [], []>} : vector<128x128xbf16>, vector<128x128xbf16>, vector<128x128xf32> -> vector<128x128xf32>
    %c5_28 = arith.constant 5 : index
    %c0_29 = arith.constant 0 : index
    %47 = vector.load %arg4[%c5_28, %c0_29] : memref<9x128xf32, #tpu.memory_space<vmem>>, vector<1x128xf32>
    %48 = vector.broadcast %47 : vector<1x128xf32> to vector<128x128xf32>
    %49 = arith.addf %46, %48 : vector<128x128xf32>
    %cst_30 = arith.constant dense<0xFF800000> : vector<128xf32>
    %50 = vector.multi_reduction <maximumf>, %49, %cst_30 [1] : vector<128x128xf32> to vector<128xf32>
    %51 = vector.shape_cast %50 : vector<128xf32> to vector<128x1xf32>
    %52 = vector.broadcast %51 : vector<128x1xf32> to vector<128x128xf32>
    %53 = arith.subf %49, %52 : vector<128x128xf32>
    %54 = math.exp %53 : vector<128x128xf32>
    %cst_31 = arith.constant dense<0.000000e+00> : vector<128xf32>
    %55 = vector.multi_reduction <add>, %54, %cst_31 [1] : vector<128x128xf32> to vector<128xf32>
    %56 = vector.shape_cast %55 : vector<128xf32> to vector<128x1xf32>
    %57 = vector.broadcast %56 : vector<128x1xf32> to vector<128x128xf32>
    %58 = arith.divf %54, %57 : vector<128x128xf32>
    %59 = vector.broadcast %5 : vector<128x1xf32> to vector<128x128xf32>
    %60 = arith.mulf %58, %59 : vector<128x128xf32>
    %61 = arith.truncf %60 : vector<128x128xf32> to vector<128x128xbf16>
    "tpu.trace_start"() <{level = 10 : i32, message = "nk,mk->nm"}> : () -> ()
    %cst_32 = arith.constant dense<0.000000e+00> : vector<128x128xf32>
    %62 = tpu.matmul %61, %61, %cst_32 {dimension_numbers = #tpu.dot_dimension_numbers<[1], [1], [0], [0], [0, 0, 1, 0], [], []>} : vector<128x128xbf16>, vector<128x128xbf16>, vector<128x128xf32> -> vector<128x128xf32>
    "tpu.trace_stop"() : () -> ()
    %63 = arith.truncf %62 : vector<128x128xf32> to vector<128x128xbf16>
    %64 = arith.truncf %42 : vector<128x128xf32> to vector<128x128xbf16>
    %cst_33 = arith.constant dense<0.000000e+00> : vector<128x128xf32>
    %65 = tpu.matmul %63, %64, %cst_33 {dimension_numbers = #tpu.dot_dimension_numbers<[1], [0], [0], [1], [0, 0, 1, 1], [], []>} : vector<128x128xbf16>, vector<128x128xbf16>, vector<128x128xf32> -> vector<128x128xf32>
    %cst_34 = arith.constant 3.000000e-01 : f32
    %66 = vector.broadcast %cst_34 : f32 to vector<128x128xf32>
    %67 = arith.mulf %66, %65 : vector<128x128xf32>
    %cst_35 = arith.constant 0.699999988 : f32
    %68 = vector.broadcast %cst_35 : f32 to vector<128x128xf32>
    %69 = arith.mulf %68, %42 : vector<128x128xf32>
    %70 = arith.addf %67, %69 : vector<128x128xf32>
    %c0_36 = arith.constant 0 : index
    %c0_37 = arith.constant 0 : index
    %71 = vector.load %arg6[%c0_36, %c0_37] : memref<128x128xf32, #tpu.memory_space<vmem>>, vector<128x128xf32>
    tpu.vector_store %arg6[%c0_36, %c0_37], %60 {strides = array<i32>} : memref<128x128xf32, #tpu.memory_space<vmem>>, vector<128x128xf32>,
    %72 = arith.truncf %70 : vector<128x128xf32> to vector<128x128xbf16>
    %cst_38 = arith.constant dense<0.000000e+00> : vector<128x128xf32>
    %73 = tpu.matmul %0, %72, %cst_38 {dimension_numbers = #tpu.dot_dimension_numbers<[1], [0], [0], [1], [0, 0, 1, 1], [], []>} : vector<128x128xbf16>, vector<128x128xbf16>, vector<128x128xf32> -> vector<128x128xf32>
    %c3 = arith.constant 3 : index
    %c0_39 = arith.constant 0 : index
    %c0_40 = arith.constant 0 : index
    %74 = vector.load %arg3[%c3, %c0_39, %c0_40] : memref<9x128x128xbf16, #tpu.memory_space<vmem>>, vector<1x128x128xbf16>
    %75 = vector.shape_cast %74 : vector<1x128x128xbf16> to vector<128x128xbf16>
    %76 = arith.truncf %73 : vector<128x128xf32> to vector<128x128xbf16>
    %cst_41 = arith.constant dense<0.000000e+00> : vector<128x128xf32>
    %77 = tpu.matmul %76, %75, %cst_41 {dimension_numbers = #tpu.dot_dimension_numbers<[1], [0], [0], [1], [0, 0, 1, 1], [], []>} : vector<128x128xbf16>, vector<128x128xbf16>, vector<128x128xf32> -> vector<128x128xf32>
    %c3_42 = arith.constant 3 : index
    %c0_43 = arith.constant 0 : index
    %78 = vector.load %arg4[%c3_42, %c0_43] : memref<9x128xf32, #tpu.memory_space<vmem>>, vector<1x128xf32>
    %79 = vector.broadcast %78 : vector<1x128xf32> to vector<128x128xf32>
    %80 = arith.addf %77, %79 : vector<128x128xf32>
    %cst_44 = arith.constant 0.000000e+00 : f32
    %81 = vector.broadcast %cst_44 : f32 to vector<128x128xf32>
    %82 = arith.maximumf %80, %81 : vector<128x128xf32>
    %83 = arith.addf %82, %70 : vector<128x128xf32>
    %84 = arith.truncf %83 : vector<128x128xf32> to vector<128x128xbf16>
    %cst_45 = arith.constant dense<0.000000e+00> : vector<128x128xf32>
    %85 = tpu.matmul %0, %84, %cst_45 {dimension_numbers = #tpu.dot_dimension_numbers<[1], [0], [0], [1], [0, 0, 1, 1], [], []>} : vector<128x128xbf16>, vector<128x128xbf16>, vector<128x128xf32> -> vector<128x128xf32>
    %c4 = arith.constant 4 : index
    %c0_46 = arith.constant 0 : index
    %c0_47 = arith.constant 0 : index
    %86 = vector.load %arg3[%c4, %c0_46, %c0_47] : memref<9x128x128xbf16, #tpu.memory_space<vmem>>, vector<1x128x128xbf16>
    %87 = vector.shape_cast %86 : vector<1x128x128xbf16> to vector<128x128xbf16>
    %88 = arith.truncf %85 : vector<128x128xf32> to vector<128x128xbf16>
    %cst_48 = arith.constant dense<0.000000e+00> : vector<128x128xf32>
    %89 = tpu.matmul %88, %87, %cst_48 {dimension_numbers = #tpu.dot_dimension_numbers<[1], [0], [0], [1], [0, 0, 1, 1], [], []>} : vector<128x128xbf16>, vector<128x128xbf16>, vector<128x128xf32> -> vector<128x128xf32>
    %c4_49 = arith.constant 4 : index
    %c0_50 = arith.constant 0 : index
    %90 = vector.load %arg4[%c4_49, %c0_50] : memref<9x128xf32, #tpu.memory_space<vmem>>, vector<1x128xf32>
    %91 = vector.broadcast %90 : vector<1x128xf32> to vector<128x128xf32>
    %92 = arith.addf %89, %91 : vector<128x128xf32>
    %cst_51 = arith.constant 0.000000e+00 : f32
    %93 = vector.broadcast %cst_51 : f32 to vector<128x128xf32>
    %94 = arith.maximumf %92, %93 : vector<128x128xf32>
    %95 = arith.addf %94, %83 : vector<128x128xf32>
    %96 = arith.truncf %11 : vector<1x128xf32> to vector<1x128xbf16>
    %97 = arith.truncf %95 : vector<128x128xf32> to vector<128x128xbf16>
    %cst_52 = arith.constant dense<0.000000e+00> : vector<1x128xf32>
    %98 = tpu.matmul %96, %97, %cst_52 {dimension_numbers = #tpu.dot_dimension_numbers<[1], [0], [0], [1], [0, 0, 1, 1], [], []>} : vector<1x128xbf16>, vector<128x128xbf16>, vector<1x128xf32> -> vector<1x128xf32>
    %c6 = arith.constant 6 : index
    %c0_53 = arith.constant 0 : index
    %c0_54 = arith.constant 0 : index
    %99 = vector.load %arg3[%c6, %c0_53, %c0_54] : memref<9x128x128xbf16, #tpu.memory_space<vmem>>, vector<1x128x128xbf16>
    %100 = vector.shape_cast %99 : vector<1x128x128xbf16> to vector<128x128xbf16>
    %101 = arith.truncf %98 : vector<1x128xf32> to vector<1x128xbf16>
    %cst_55 = arith.constant dense<0.000000e+00> : vector<1x128xf32>
    %102 = tpu.matmul %101, %100, %cst_55 {dimension_numbers = #tpu.dot_dimension_numbers<[1], [0], [0], [1], [0, 0, 1, 1], [], []>} : vector<1x128xbf16>, vector<128x128xbf16>, vector<1x128xf32> -> vector<1x128xf32>
    %c6_56 = arith.constant 6 : index
    %c0_57 = arith.constant 0 : index
    %103 = vector.load %arg4[%c6_56, %c0_57] : memref<9x128xf32, #tpu.memory_space<vmem>>, vector<1x128xf32>
    %104 = arith.addf %102, %103 : vector<1x128xf32>
    %cst_58 = arith.constant 0.000000e+00 : f32
    %105 = vector.broadcast %cst_58 : f32 to vector<1x128xf32>
    %106 = arith.maximumf %104, %105 : vector<1x128xf32>
    %c7 = arith.constant 7 : index
    %c0_59 = arith.constant 0 : index
    %c0_60 = arith.constant 0 : index
    %107 = vector.load %arg3[%c7, %c0_59, %c0_60] : memref<9x128x128xbf16, #tpu.memory_space<vmem>>, vector<1x128x128xbf16>
    %108 = vector.shape_cast %107 : vector<1x128x128xbf16> to vector<128x128xbf16>
    %109 = arith.truncf %106 : vector<1x128xf32> to vector<1x128xbf16>
    %cst_61 = arith.constant dense<0.000000e+00> : vector<1x128xf32>
    %110 = tpu.matmul %109, %108, %cst_61 {dimension_numbers = #tpu.dot_dimension_numbers<[1], [0], [0], [1], [0, 0, 1, 1], [], []>} : vector<1x128xbf16>, vector<128x128xbf16>, vector<1x128xf32> -> vector<1x128xf32>
    %c7_62 = arith.constant 7 : index
    %c0_63 = arith.constant 0 : index
    %111 = vector.load %arg4[%c7_62, %c0_63] : memref<9x128xf32, #tpu.memory_space<vmem>>, vector<1x128xf32>
    %112 = arith.addf %110, %111 : vector<1x128xf32>
    %cst_64 = arith.constant 0.000000e+00 : f32
    %113 = vector.broadcast %cst_64 : f32 to vector<1x128xf32>
    %114 = arith.maximumf %112, %113 : vector<1x128xf32>
    %c8 = arith.constant 8 : index
    %c0_65 = arith.constant 0 : index
    %c0_66 = arith.constant 0 : index
    %115 = vector.load %arg3[%c8, %c0_65, %c0_66] : memref<9x128x128xbf16, #tpu.memory_space<vmem>>, vector<1x128x128xbf16>
    %116 = vector.shape_cast %115 : vector<1x128x128xbf16> to vector<128x128xbf16>
    %117 = arith.truncf %114 : vector<1x128xf32> to vector<1x128xbf16>
    %cst_67 = arith.constant dense<0.000000e+00> : vector<1x128xf32>
    %118 = tpu.matmul %117, %116, %cst_67 {dimension_numbers = #tpu.dot_dimension_numbers<[1], [0], [0], [1], [0, 0, 1, 1], [], []>} : vector<1x128xbf16>, vector<128x128xbf16>, vector<1x128xf32> -> vector<1x128xf32>
    %c8_68 = arith.constant 8 : index
    %c0_69 = arith.constant 0 : index
    %119 = vector.load %arg4[%c8_68, %c0_69] : memref<9x128xf32, #tpu.memory_space<vmem>>, vector<1x128xf32>
    %120 = arith.addf %118, %119 : vector<1x128xf32>
    %c0_70 = arith.constant 0 : index
    %c0_71 = arith.constant 0 : index
    %121 = vector.load %arg5[%c0_70, %c0_71] : memref<1x128xf32, #tpu.memory_space<vmem>>, vector<1x128xf32>
    tpu.vector_store %arg5[%c0_70, %c0_71], %120 {strides = array<i32>} : memref<1x128xf32, #tpu.memory_space<vmem>>, vector<1x128xf32>,
    return
  }
  func.func @transform_0(%arg0: i32) -> (i32, i32) {
    %c0_i32 = arith.constant 0 : i32
    %c0_i32_0 = arith.constant 0 : i32
    %c0_i32_1 = arith.constant 0 : i32
    return %c0_i32, %c0_i32_0 : i32, i32
  }
  func.func @transform_1(%arg0: i32) -> (i32, i32) {
    %c0_i32 = arith.constant 0 : i32
    %c0_i32_0 = arith.constant 0 : i32
    %c0_i32_1 = arith.constant 0 : i32
    return %c0_i32, %c0_i32_0 : i32, i32
  }
  func.func @transform_2(%arg0: i32) -> (i32, i32, i32) {
    %c0_i32 = arith.constant 0 : i32
    %c0_i32_0 = arith.constant 0 : i32
    %c0_i32_1 = arith.constant 0 : i32
    %c0_i32_2 = arith.constant 0 : i32
    return %c0_i32, %c0_i32_0, %c0_i32_1 : i32, i32, i32
  }
  func.func @transform_3(%arg0: i32) -> (i32, i32) {
    %c0_i32 = arith.constant 0 : i32
    %c0_i32_0 = arith.constant 0 : i32
    %c0_i32_1 = arith.constant 0 : i32
    return %c0_i32, %c0_i32_0 : i32, i32
  }
  func.func @transform_4(%arg0: i32) -> (i32, i32) {
    %c0_i32 = arith.constant 0 : i32
    %c0_i32_0 = arith.constant 0 : i32
    %c0_i32_1 = arith.constant 0 : i32
    return %c0_i32, %c0_i32_0 : i32, i32
  }
  func.func @transform_5(%arg0: i32) -> (i32, i32) {
    %c0_i32 = arith.constant 0 : i32
    %c0_i32_0 = arith.constant 0 : i32
    %c0_i32_1 = arith.constant 0 : i32
    return %c0_i32, %c0_i32_0 : i32, i32
  }
}

</mosaic_0001>

<llo_original>
// kernel: tpu_custom_call.1
$region0: #{tpu_custom_call.1}
  #allocation0 [shape = 'u32[]', space=smem, size = 0x4, offset = 0x4, fixed_abs, tag = 'smem constant byte address 0x4 - core index']
  #allocation1 [shape = 'u32[144,128]{1,0:T(1,128)}', space=vmem, size = 0x12000, scoped, tag = 'internal scratch']
  %s0 = inlined_call_operand.hbm [shape: bf16[128,128], index: 0, kind: input, shape index: {}]
  %s1 = inlined_call_operand.hbm [shape: bf16[128,128], index: 1, kind: input, shape index: {}]
  %s2 = inlined_call_operand.hbm [shape: bf16[9,128,128], index: 2, kind: input, shape index: {}]
  %s3 = inlined_call_operand.hbm [shape: f32[9,128], index: 3, kind: input, shape index: {}]
  %s4 = inlined_call_operand.hbm [shape: f32[1,128], index: 4, kind: output, shape index: {0}]
  %s5 = inlined_call_operand.hbm [shape: f32[128,128], index: 5, kind: output, shape index: {1}]
  %6 = xla_tuple %s4, %s5
  %s7 = sld [smem:[#allocation0]]
  $region50: #{tpu_custom_call.1} parent=0
    _
  %s9 = ssub.s32 1, %s7
  %s10 = scalar_select 0, %s9, %s7
  $region1: #{tpu_custom_call.1} parent=0
    #allocation2 [shape = 'u8[32768]{0}', space=vmem, size = 0x8000, scoped, tag = 'input window, operand 0, single buffered']
    #allocation3 [shape = 's32[1]{0}', space=sflag, size = 0x4, scoped, tag = 'scoped memory for tpu_custom_call.1']
    #allocation4 [shape = 's32[1]{0}', space=sflag, size = 0x4, scoped, tag = 'scoped memory for tpu_custom_call.1']
    #allocation5 [shape = 'u8[32768]{0}', space=vmem, size = 0x8000, scoped, tag = 'input window, operand 1, single buffered']
    #allocation6 [shape = 's32[1]{0}', space=sflag, size = 0x4, scoped, tag = 'scoped memory for tpu_custom_call.1']
    #allocation7 [shape = 'u8[294912]{0}', space=vmem, size = 0x48000, scoped, tag = 'input window, operand 2, single buffered']
    #allocation8 [shape = 'u8[8192]{0}', space=vmem, size = 0x2000, scoped, tag = 'input window, operand 3, single buffered']
    #allocation9 [shape = 's32[1]{0}', space=sflag, size = 0x4, scoped, tag = 'scoped memory for tpu_custom_call.1']
    #allocation10 [shape = 'u8[512]{0}', space=vmem, size = 0x400, scoped, tag = 'output window, operand 0, single buffered']
    #allocation11 [shape = 'u8[65536]{0}', space=vmem, size = 0x10000, scoped, tag = 'output window, operand 1, single buffered']
    #allocation12 [shape = 's32[1]{0}', space=sflag, size = 0x4, scoped, tag = 'scoped memory for tpu_custom_call.1']
    %11 = vsyncpa [#allocation3], 0
    %12 = vsyncpa [#allocation6], 0
    %13 = vsyncpa [#allocation9], 0
    %14 = vsyncpa [#allocation4], 0
    %15 = vsyncpa [#allocation12], 0
    // Predicated region
    $region2: #{tpu_custom_call.1} parent=1 // pred_check
      _
    $region3: #{tpu_custom_call.1} parent=1 // pred_check_branch
      %17 = sbr.rel (0) target = $region5
    $region4: #{tpu_custom_call.1} parent=1 // pred_region
      %s19 = ssub.s32 1024, 1024
      %20 = vsyncadd [#allocation3], %s19
      %s21 = sshll.u32 [#allocation2], 4
      %s22 = int_to_ptr.vmem [resolvable:$true] %s21
      %27 = dma.hbm_to_vmem [thread:$0]  %s0, 1024, %s22, [#allocation3], 64, 64, 4
    $region5: #{tpu_custom_call.1} parent=1 // pred_fallthru
      _
    // Predicated region
    $region6: #{tpu_custom_call.1} parent=1 // pred_check
      _
    $region7: #{tpu_custom_call.1} parent=1 // pred_check_branch
      %29 = sbr.rel (0) target = $region9
    $region8: #{tpu_custom_call.1} parent=1 // pred_region
      %s31 = ssub.s32 1024, 1024
      %32 = vsyncadd [#allocation6], %s31
      %s33 = sshll.u32 [#allocation5], 4
      %s34 = int_to_ptr.vmem [resolvable:$true] %s33
      %39 = dma.hbm_to_vmem [thread:$0]  %s1, 1024, %s34, [#allocation6], 64, 64, 4
    $region9: #{tpu_custom_call.1} parent=1 // pred_fallthru
      _
    // Predicated region
    $region10: #{tpu_custom_call.1} parent=1 // pred_check
      _
    $region11: #{tpu_custom_call.1} parent=1 // pred_check_branch
      %41 = sbr.rel (0) target = $region13
    $region12: #{tpu_custom_call.1} parent=1 // pred_region
      %s43 = ssub.s32 9216, 9216
      %44 = vsyncadd [#allocation6], %s43
      %s45 = sshll.u32 [#allocation7], 4
      %s46 = int_to_ptr.vmem [resolvable:$true] %s45
      %51 = dma.hbm_to_vmem [thread:$0]  %s2, 9216, %s46, [#allocation6], 64, 64, 4
    $region13: #{tpu_custom_call.1} parent=1 // pred_fallthru
      _
    // Predicated region
    $region14: #{tpu_custom_call.1} parent=1 // pred_check
      _
    $region15: #{tpu_custom_call.1} parent=1 // pred_check_branch
      %53 = sbr.rel (0) target = $region17
    $region16: #{tpu_custom_call.1} parent=1 // pred_region
      %s55 = ssub.s32 256, 256
      %56 = vsyncadd [#allocation9], %s55
      %s57 = sshll.u32 [#allocation8], 4
      %s58 = int_to_ptr.vmem [resolvable:$true] %s57
      %63 = dma.hbm_to_vmem [thread:$0]  %s3, 256, %s58, [#allocation9], 128, 128, 8
    $region17: #{tpu_custom_call.1} parent=1 // pred_fallthru
      _
    // Predicated region
    $region18: #{tpu_custom_call.1} parent=1 // pred_check
      _
    $region19: #{tpu_custom_call.1} parent=1 // pred_check_branch
      %65 = sbr.rel (0) target = $region21
    $region20: #{tpu_custom_call.1} parent=1 // pred_region
      %66 = dma.done [#allocation3], 1024
    $region21: #{tpu_custom_call.1} parent=1 // pred_fallthru
      _
    // Predicated region
    $region22: #{tpu_custom_call.1} parent=1 // pred_check
      _
    $region23: #{tpu_custom_call.1} parent=1 // pred_check_branch
      %68 = sbr.rel (0) target = $region25
    $region24: #{tpu_custom_call.1} parent=1 // pred_region
      %69 = dma.done [#allocation6], 1024
    $region25: #{tpu_custom_call.1} parent=1 // pred_fallthru
      _
    // Predicated region
    $region26: #{tpu_custom_call.1} parent=1 // pred_check
      _
    $region27: #{tpu_custom_call.1} parent=1 // pred_check_branch
      %71 = sbr.rel (0) target = $region29
    $region28: #{tpu_custom_call.1} parent=1 // pred_region
      %72 = dma.done [#allocation6], 9216
    $region29: #{tpu_custom_call.1} parent=1 // pred_fallthru
      _
    // Predicated region
    $region30: #{tpu_custom_call.1} parent=1 // pred_check
      _
    $region31: #{tpu_custom_call.1} parent=1 // pred_check_branch
      %74 = sbr.rel (0) target = $region33
    $region32: #{tpu_custom_call.1} parent=1 // pred_region
      %75 = dma.done [#allocation9], 256
    $region33: #{tpu_custom_call.1} parent=1 // pred_fallthru
      _
    %v77 = vld [vmem:[#allocation2] sm:$0xf]
    %v78 = vld [vmem:[#allocation2 + $0x4] sm:$0xf]
    %v79 = vld [vmem:[#allocation2 + $0x8] sm:$0xf]
    %v80 = vld [vmem:[#allocation2 + $0xc] sm:$0xf]
    %v81 = vld [vmem:[#allocation2 + $0x10] sm:$0xf]
    %v82 = vld [vmem:[#allocation2 + $0x14] sm:$0xf]
    %v83 = vld [vmem:[#allocation2 + $0x18] sm:$0xf]
    %v84 = vld [vmem:[#allocation2 + $0x1c] sm:$0xf]
    %v85 = vld [vmem:[#allocation2 + $0x20] sm:$0xf]
    %v86 = vld [vmem:[#allocation2 + $0x24] sm:$0xf]
    %v87 = vld [vmem:[#allocation2 + $0x28] sm:$0xf]
    %v88 = vld [vmem:[#allocation2 + $0x2c] sm:$0xf]
    %v89 = vld [vmem:[#allocation2 + $0x30] sm:$0xf]
    %v90 = vld [vmem:[#allocation2 + $0x34] sm:$0xf]
    %v91 = vld [vmem:[#allocation2 + $0x38] sm:$0xf]
    %v92 = vld [vmem:[#allocation2 + $0x3c] sm:$0xf]
    %v93 = vlaneseq
    %v94 = vshrl.u32 %v93, 7
    %v95 = vadd.s32 %v94, 8
    %v96 = vadd.s32 %v94, 16
    %v97 = vadd.s32 %v94, 24
    %v98 = vadd.s32 %v94, 32
    %v99 = vadd.s32 %v94, 40
    %v100 = vadd.s32 %v94, 48
    %v101 = vadd.s32 %v94, 56
    %v102 = vadd.s32 %v94, 64
    %v103 = vadd.s32 %v94, 72
    %v104 = vadd.s32 %v94, 80
    %v105 = vadd.s32 %v94, 88
    %v106 = vadd.s32 %v94, 96
    %v107 = vadd.s32 %v94, 104
    %v108 = vadd.s32 %v94, 112
    %v109 = vadd.s32 %v94, 120
    %vm110 = vcmp.lt.s32.totalorder %v94, 16
    %vm111 = vcmp.lt.s32.totalorder %v95, 16
    %vm112 = vcmp.lt.s32.totalorder %v96, 16
    %vm113 = vcmp.lt.s32.totalorder %v97, 16
    %vm114 = vcmp.lt.s32.totalorder %v98, 16
    %vm115 = vcmp.lt.s32.totalorder %v99, 16
    %vm116 = vcmp.lt.s32.totalorder %v100, 16
    %vm117 = vcmp.lt.s32.totalorder %v101, 16
    %vm118 = vcmp.lt.s32.totalorder %v102, 16
    %vm119 = vcmp.lt.s32.totalorder %v103, 16
    %vm120 = vcmp.lt.s32.totalorder %v104, 16
    %vm121 = vcmp.lt.s32.totalorder %v105, 16
    %vm122 = vcmp.lt.s32.totalorder %v106, 16
    %vm123 = vcmp.lt.s32.totalorder %v107, 16
    %vm124 = vcmp.lt.s32.totalorder %v108, 16
    %vm125 = vcmp.lt.s32.totalorder %v109, 16
    %v126 = vsel %vm110, 1, 0
    %v127 = vsel %vm111, 1, 0
    %v128 = vsel %vm112, 1, 0
    %v129 = vsel %vm113, 1, 0
    %v130 = vsel %vm114, 1, 0
    %v131 = vsel %vm115, 1, 0
    %v132 = vsel %vm116, 1, 0
    %v133 = vsel %vm117, 1, 0
    %v134 = vsel %vm118, 1, 0
    %v135 = vsel %vm119, 1, 0
    %v136 = vsel %vm120, 1, 0
    %v137 = vsel %vm121, 1, 0
    %v138 = vsel %vm122, 1, 0
    %v139 = vsel %vm123, 1, 0
    %v140 = vsel %vm124, 1, 0
    %v141 = vsel %vm125, 1, 0
    %v142 = vcvt.s32.f32 %v126
    %v143 = vcvt.s32.f32 %v127
    %v144 = vcvt.s32.f32 %v128
    %v145 = vcvt.s32.f32 %v129
    %v146 = vcvt.s32.f32 %v130
    %v147 = vcvt.s32.f32 %v131
    %v148 = vcvt.s32.f32 %v132
    %v149 = vcvt.s32.f32 %v133
    %v150 = vcvt.s32.f32 %v134
    %v151 = vcvt.s32.f32 %v135
    %v152 = vcvt.s32.f32 %v136
    %v153 = vcvt.s32.f32 %v137
    %v154 = vcvt.s32.f32 %v138
    %v155 = vcvt.s32.f32 %v139
    %v156 = vcvt.s32.f32 %v140
    %v157 = vcvt.s32.f32 %v141
    %v158 = vlaneseq
    %v159 = vand.u32 %v158, 127
    %vm160 = vcmp.lt.s32.totalorder %v159, 16
    %v161 = vsel %vm160, 0.0625, 0.0
    %v162 = vld [vmem:[#allocation5] sm:$0xf]
    %v163 = vld [vmem:[#allocation5 + $0x4] sm:$0xf]
    %v164 = vld [vmem:[#allocation5 + $0x8] sm:$0xf]
    %v165 = vld [vmem:[#allocation5 + $0xc] sm:$0xf]
    %v166 = vld [vmem:[#allocation5 + $0x10] sm:$0xf]
    %v167 = vld [vmem:[#allocation5 + $0x14] sm:$0xf]
    %v168 = vld [vmem:[#allocation5 + $0x18] sm:$0xf]
    %v169 = vld [vmem:[#allocation5 + $0x1c] sm:$0xf]
    %v170 = vld [vmem:[#allocation5 + $0x20] sm:$0xf]
    %v171 = vld [vmem:[#allocation5 + $0x24] sm:$0xf]
    %v172 = vld [vmem:[#allocation5 + $0x28] sm:$0xf]
    %v173 = vld [vmem:[#allocation5 + $0x2c] sm:$0xf]
    %v174 = vld [vmem:[#allocation5 + $0x30] sm:$0xf]
    %v175 = vld [vmem:[#allocation5 + $0x34] sm:$0xf]
    %v176 = vld [vmem:[#allocation5 + $0x38] sm:$0xf]
    %v177 = vld [vmem:[#allocation5 + $0x3c] sm:$0xf]
    %v178 = vld [vmem:[#allocation7] sm:$0xf]
    %v179 = vld [vmem:[#allocation7 + $0x4] sm:$0xf]
    %v180 = vld [vmem:[#allocation7 + $0x8] sm:$0xf]
    %v181 = vld [vmem:[#allocation7 + $0xc] sm:$0xf]
    %v182 = vld [vmem:[#allocation7 + $0x10] sm:$0xf]
    %v183 = vld [vmem:[#allocation7 + $0x14] sm:$0xf]
    %v184 = vld [vmem:[#allocation7 + $0x18] sm:$0xf]
    %v185 = vld [vmem:[#allocation7 + $0x1c] sm:$0xf]
    %v186 = vld [vmem:[#allocation7 + $0x20] sm:$0xf]
    %v187 = vld [vmem:[#allocation7 + $0x24] sm:$0xf]
    %v188 = vld [vmem:[#allocation7 + $0x28] sm:$0xf]
    %v189 = vld [vmem:[#allocation7 + $0x2c] sm:$0xf]
    %v190 = vld [vmem:[#allocation7 + $0x30] sm:$0xf]
    %v191 = vld [vmem:[#allocation7 + $0x34] sm:$0xf]
    %v192 = vld [vmem:[#allocation7 + $0x38] sm:$0xf]
    %v193 = vld [vmem:[#allocation7 + $0x3c] sm:$0xf]
    %v194 = vld [vmem:[#allocation8] sm:$0x1]
    %v195 = vlaneseq
    %v196 = vshrl.u32 %v195, 7
    %v197 = vsub.s32 0, %v196
    %v198 = vrot.slane %v194, %v197
    %v215 = vunpack.c.l.b16 %v162
    %v216 = vunpack.c.l.b16 %v163
    %v217 = vunpack.c.l.b16 %v164
    %v218 = vunpack.c.l.b16 %v165
    %v219 = vunpack.c.l.b16 %v166
    %v220 = vunpack.c.l.b16 %v167
    %v221 = vunpack.c.l.b16 %v168
    %v222 = vunpack.c.l.b16 %v169
    %v223 = vunpack.c.l.b16 %v170
    %v224 = vunpack.c.l.b16 %v171
    %v225 = vunpack.c.l.b16 %v172
    %v226 = vunpack.c.l.b16 %v173
    %v227 = vunpack.c.l.b16 %v174
    %v228 = vunpack.c.l.b16 %v175
    %v229 = vunpack.c.l.b16 %v176
    %v230 = vunpack.c.l.b16 %v177
    %v231 = vpack.c.b16 %v216, %v215
    %v232 = vpack.c.b16 %v218, %v217
    %v233 = vpack.c.b16 %v220, %v219
    %v234 = vpack.c.b16 %v222, %v221
    %v235 = vpack.c.b16 %v224, %v223
    %v236 = vpack.c.b16 %v226, %v225
    %v237 = vpack.c.b16 %v228, %v227
    %v238 = vpack.c.b16 %v230, %v229
    %v263 = vunpack.c.l.b16 %v178
    %v264 = vunpack.c.l.b16 %v179
    %v265 = vunpack.c.l.b16 %v180
    %v266 = vunpack.c.l.b16 %v181
    %v267 = vunpack.c.l.b16 %v182
    %v268 = vunpack.c.l.b16 %v183
    %v269 = vunpack.c.l.b16 %v184
    %v270 = vunpack.c.l.b16 %v185
    %v271 = vunpack.c.l.b16 %v186
    %v272 = vunpack.c.l.b16 %v187
    %v273 = vunpack.c.l.b16 %v188
    %v274 = vunpack.c.l.b16 %v189
    %v275 = vunpack.c.l.b16 %v190
    %v276 = vunpack.c.l.b16 %v191
    %v277 = vunpack.c.l.b16 %v192
    %v278 = vunpack.c.l.b16 %v193
    %v279 = vpack.c.b16 %v264, %v263
    %v280 = vpack.c.b16 %v266, %v265
    %v281 = vpack.c.b16 %v268, %v267
    %v282 = vpack.c.b16 %v270, %v269
    %v283 = vpack.c.b16 %v272, %v271
    %v284 = vpack.c.b16 %v274, %v273
    %v285 = vpack.c.b16 %v276, %v275
    %v286 = vpack.c.b16 %v278, %v277
    %295 = vmatprep.subr.bf16.mxu0 0
    %296 = vmatpush1.bf16.msra.mxu0 %v286
    %297 = vmatprep.subr.bf16.mxu0 0
    %298 = vmatpush1.bf16.msra.mxu0 %v285
    %299 = vmatprep.subr.bf16.mxu0 0
    %300 = vmatpush1.bf16.msra.mxu0 %v284
    %301 = vmatprep.subr.bf16.mxu0 0
    %302 = vmatpush1.bf16.msra.mxu0 %v283
    %303 = vmatprep.subr.bf16.mxu0 0
    %304 = vmatpush1.bf16.msra.mxu0 %v282
    %305 = vmatprep.subr.bf16.mxu0 0
    %306 = vmatpush1.bf16.msra.mxu0 %v281
    %307 = vmatprep.subr.bf16.mxu0 0
    %308 = vmatpush1.bf16.msra.mxu0 %v280
    %309 = vmatprep.subr.bf16.mxu0 0
    %310 = vmatpush1.bf16.msra.mxu0 %v279
    %311 = vmatprep.subr.bf16.mxu0 0
    %312 = vmatpush2.bf16.msra.mxu0 0
    %313 = vmatprep.subr.bf16.mxu0 0
    %314 = vmatpush2.bf16.msra.mxu0 0
    %315 = vmatprep.subr.bf16.mxu0 0
    %316 = vmatpush2.bf16.msra.mxu0 0
    %317 = vmatprep.subr.bf16.mxu0 0
    %318 = vmatpush2.bf16.msra.mxu0 0
    %319 = vmatprep.subr.bf16.mxu0 0
    %320 = vmatpush2.bf16.msra.mxu0 0
    %321 = vmatprep.subr.bf16.mxu0 0
    %322 = vmatpush2.bf16.msra.mxu0 0
    %323 = vmatprep.subr.bf16.mxu0 0
    %324 = vmatpush2.bf16.msra.mxu0 0
    %325 = vmatprep.subr.bf16.mxu0 0
    %326 = vmatpush2.bf16.msra.mxu0 0
    %327 = vmatprep.mubr.bf16.mxu0 0
    %328 = vmatmul.mubr.bf16.gmra.mxu0 %v231
    %v329 = vpop.f32.mrf.mxu0
    %v330 = vadd.f32 %v198, %v329
    %v331 = vpop.f32.mrf.mxu0
    %v332 = vpop.f32.mrf.mxu0
    %v333 = vadd.f32 %v198, %v332
    %v334 = vpop.f32.mrf.mxu0
    %335 = vmatprep.mubr.bf16.mxu0 0
    %336 = vmatmul.mubr.bf16.gmra.mxu0 %v232
    %v337 = vpop.f32.mrf.mxu0
    %v338 = vadd.f32 %v198, %v337
    %v339 = vpop.f32.mrf.mxu0
    %v340 = vpop.f32.mrf.mxu0
    %v341 = vadd.f32 %v198, %v340
    %v342 = vpop.f32.mrf.mxu0
    %343 = vmatprep.mubr.bf16.mxu0 0
    %344 = vmatmul.mubr.bf16.gmra.mxu0 %v233
    %v345 = vpop.f32.mrf.mxu0
    %v346 = vadd.f32 %v198, %v345
    %v347 = vpop.f32.mrf.mxu0
    %v348 = vpop.f32.mrf.mxu0
    %v349 = vadd.f32 %v198, %v348
    %v350 = vpop.f32.mrf.mxu0
    %351 = vmatprep.mubr.bf16.mxu0 0
    %352 = vmatmul.mubr.bf16.gmra.mxu0 %v234
    %v353 = vpop.f32.mrf.mxu0
    %v354 = vadd.f32 %v198, %v353
    %v355 = vpop.f32.mrf.mxu0
    %v356 = vpop.f32.mrf.mxu0
    %v357 = vadd.f32 %v198, %v356
    %v358 = vpop.f32.mrf.mxu0
    %359 = vmatprep.mubr.bf16.mxu0 0
    %360 = vmatmul.mubr.bf16.gmra.mxu0 %v235
    %v361 = vpop.f32.mrf.mxu0
    %v362 = vadd.f32 %v198, %v361
    %v363 = vpop.f32.mrf.mxu0
    %v364 = vpop.f32.mrf.mxu0
    %v365 = vadd.f32 %v198, %v364
    %v366 = vpop.f32.mrf.mxu0
    %367 = vmatprep.mubr.bf16.mxu0 0
    %368 = vmatmul.mubr.bf16.gmra.mxu0 %v236
    %v369 = vpop.f32.mrf.mxu0
    %v370 = vadd.f32 %v198, %v369
    %v371 = vpop.f32.mrf.mxu0
    %v372 = vpop.f32.mrf.mxu0
    %v373 = vadd.f32 %v198, %v372
    %v374 = vpop.f32.mrf.mxu0
    %375 = vmatprep.mubr.bf16.mxu0 0
    %376 = vmatmul.mubr.bf16.gmra.mxu0 %v237
    %v377 = vpop.f32.mrf.mxu0
    %v378 = vadd.f32 %v198, %v377
    %v379 = vpop.f32.mrf.mxu0
    %v380 = vpop.f32.mrf.mxu0
    %v381 = vadd.f32 %v198, %v380
    %v382 = vpop.f32.mrf.mxu0
    %383 = vmatprep.mubr.bf16.mxu0 0
    %384 = vmatmul.mubr.bf16.gmra.mxu0 %v238
    %v385 = vpop.f32.mrf.mxu0
    %v386 = vadd.f32 %v198, %v385
    %v387 = vpop.f32.mrf.mxu0
    %v388 = vpop.f32.mrf.mxu0
    %v389 = vadd.f32 %v198, %v388
    %v390 = vpop.f32.mrf.mxu0
    %391 = vdwg.mxu0
    %v392 = vpack.c.bf16 %v333, %v330
    %v393 = vpack.c.bf16 %v341, %v338
    %v394 = vpack.c.bf16 %v349, %v346
    %v395 = vpack.c.bf16 %v357, %v354
    %v396 = vpack.c.bf16 %v365, %v362
    %v397 = vpack.c.bf16 %v373, %v370
    %v398 = vpack.c.bf16 %v381, %v378
    %v399 = vpack.c.bf16 %v389, %v386
    %v416 = vunpack.c.l.b16 %v77
    %v417 = vunpack.c.l.b16 %v78
    %v418 = vunpack.c.l.b16 %v79
    %v419 = vunpack.c.l.b16 %v80
    %v420 = vunpack.c.l.b16 %v81
    %v421 = vunpack.c.l.b16 %v82
    %v422 = vunpack.c.l.b16 %v83
    %v423 = vunpack.c.l.b16 %v84
    %v424 = vunpack.c.l.b16 %v85
    %v425 = vunpack.c.l.b16 %v86
    %v426 = vunpack.c.l.b16 %v87
    %v427 = vunpack.c.l.b16 %v88
    %v428 = vunpack.c.l.b16 %v89
    %v429 = vunpack.c.l.b16 %v90
    %v430 = vunpack.c.l.b16 %v91
    %v431 = vunpack.c.l.b16 %v92
    %v432 = vpack.c.b16 %v417, %v416
    %v433 = vpack.c.b16 %v419, %v418
    %v434 = vpack.c.b16 %v421, %v420
    %v435 = vpack.c.b16 %v423, %v422
    %v436 = vpack.c.b16 %v425, %v424
    %v437 = vpack.c.b16 %v427, %v426
    %v438 = vpack.c.b16 %v429, %v428
    %v439 = vpack.c.b16 %v431, %v430
    %448 = vmatprep.subr.bf16.mxu0 0
    %449 = vmatpush1.bf16.msra.mxu0 %v399
    %450 = vmatprep.subr.bf16.mxu0 0
    %451 = vmatpush1.bf16.msra.mxu0 %v398
    %452 = vmatprep.subr.bf16.mxu0 0
    %453 = vmatpush1.bf16.msra.mxu0 %v397
    %454 = vmatprep.subr.bf16.mxu0 0
    %455 = vmatpush1.bf16.msra.mxu0 %v396
    %456 = vmatprep.subr.bf16.mxu0 0
    %457 = vmatpush1.bf16.msra.mxu0 %v395
    %458 = vmatprep.subr.bf16.mxu0 0
    %459 = vmatpush1.bf16.msra.mxu0 %v394
    %460 = vmatprep.subr.bf16.mxu0 0
    %461 = vmatpush1.bf16.msra.mxu0 %v393
    %462 = vmatprep.subr.bf16.mxu0 0
    %463 = vmatpush1.bf16.msra.mxu0 %v392
    %464 = vmatprep.subr.bf16.mxu0 0
    %465 = vmatpush2.bf16.msra.mxu0 0
    %466 = vmatprep.subr.bf16.mxu0 0
    %467 = vmatpush2.bf16.msra.mxu0 0
    %468 = vmatprep.subr.bf16.mxu0 0
    %469 = vmatpush2.bf16.msra.mxu0 0
    %470 = vmatprep.subr.bf16.mxu0 0
    %471 = vmatpush2.bf16.msra.mxu0 0
    %472 = vmatprep.subr.bf16.mxu0 0
    %473 = vmatpush2.bf16.msra.mxu0 0
    %474 = vmatprep.subr.bf16.mxu0 0
    %475 = vmatpush2.bf16.msra.mxu0 0
    %476 = vmatprep.subr.bf16.mxu0 0
    %477 = vmatpush2.bf16.msra.mxu0 0
    %478 = vmatprep.subr.bf16.mxu0 0
    %479 = vmatpush2.bf16.msra.mxu0 0
    %480 = vmatprep.mubr.bf16.mxu0 0
    %481 = vmatmul.mubr.bf16.gmra.mxu0 %v432
    %v482 = vpop.f32.mrf.mxu0
    %v483 = vadd.f32 0.0, %v482
    %v484 = vpop.f32.mrf.mxu0
    %v485 = vpop.f32.mrf.mxu0
    %v486 = vadd.f32 0.0, %v485
    %v487 = vpop.f32.mrf.mxu0
    %488 = vmatprep.mubr.bf16.mxu0 0
    %489 = vmatmul.mubr.bf16.gmra.mxu0 %v433
    %v490 = vpop.f32.mrf.mxu0
    %v491 = vadd.f32 0.0, %v490
    %v492 = vpop.f32.mrf.mxu0
    %v493 = vpop.f32.mrf.mxu0
    %v494 = vadd.f32 0.0, %v493
    %v495 = vpop.f32.mrf.mxu0
    %496 = vmatprep.mubr.bf16.mxu0 0
    %497 = vmatmul.mubr.bf16.gmra.mxu0 %v434
    %v498 = vpop.f32.mrf.mxu0
    %v499 = vadd.f32 0.0, %v498
    %v500 = vpop.f32.mrf.mxu0
    %v501 = vpop.f32.mrf.mxu0
    %v502 = vadd.f32 0.0, %v501
    %v503 = vpop.f32.mrf.mxu0
    %504 = vmatprep.mubr.bf16.mxu0 0
    %505 = vmatmul.mubr.bf16.gmra.mxu0 %v435
    %v506 = vpop.f32.mrf.mxu0
    %v507 = vadd.f32 0.0, %v506
    %v508 = vpop.f32.mrf.mxu0
    %v509 = vpop.f32.mrf.mxu0
    %v510 = vadd.f32 0.0, %v509
    %v511 = vpop.f32.mrf.mxu0
    %512 = vmatprep.mubr.bf16.mxu0 0
    %513 = vmatmul.mubr.bf16.gmra.mxu0 %v436
    %v514 = vpop.f32.mrf.mxu0
    %v515 = vadd.f32 0.0, %v514
    %v516 = vpop.f32.mrf.mxu0
    %v517 = vpop.f32.mrf.mxu0
    %v518 = vadd.f32 0.0, %v517
    %v519 = vpop.f32.mrf.mxu0
    %520 = vmatprep.mubr.bf16.mxu0 0
    %521 = vmatmul.mubr.bf16.gmra.mxu0 %v437
    %v522 = vpop.f32.mrf.mxu0
    %v523 = vadd.f32 0.0, %v522
    %v524 = vpop.f32.mrf.mxu0
    %v525 = vpop.f32.mrf.mxu0
    %v526 = vadd.f32 0.0, %v525
    %v527 = vpop.f32.mrf.mxu0
    %528 = vmatprep.mubr.bf16.mxu0 0
    %529 = vmatmul.mubr.bf16.gmra.mxu0 %v438
    %v530 = vpop.f32.mrf.mxu0
    %v531 = vadd.f32 0.0, %v530
    %v532 = vpop.f32.mrf.mxu0
    %v533 = vpop.f32.mrf.mxu0
    %v534 = vadd.f32 0.0, %v533
    %v535 = vpop.f32.mrf.mxu0
    %536 = vmatprep.mubr.bf16.mxu0 0
    %537 = vmatmul.mubr.bf16.gmra.mxu0 %v439
    %v538 = vpop.f32.mrf.mxu0
    %v539 = vadd.f32 0.0, %v538
    %v540 = vpop.f32.mrf.mxu0
    %v541 = vpop.f32.mrf.mxu0
    %v542 = vadd.f32 0.0, %v541
    %v543 = vpop.f32.mrf.mxu0
    %544 = vdwg.mxu0
    %s545 = scalar_lea.vmem [#allocation7], 64
    %v546 = vld [vmem:[%s545] sm:$0xf]
    %v547 = vld [vmem:[%s545 + $0x4] sm:$0xf]
    %v548 = vld [vmem:[%s545 + $0x8] sm:$0xf]
    %v549 = vld [vmem:[%s545 + $0xc] sm:$0xf]
    %v550 = vld [vmem:[%s545 + $0x10] sm:$0xf]
    %v551 = vld [vmem:[%s545 + $0x14] sm:$0xf]
    %v552 = vld [vmem:[%s545 + $0x18] sm:$0xf]
    %v553 = vld [vmem:[%s545 + $0x1c] sm:$0xf]
    %v554 = vld [vmem:[%s545 + $0x20] sm:$0xf]
    %v555 = vld [vmem:[%s545 + $0x24] sm:$0xf]
    %v556 = vld [vmem:[%s545 + $0x28] sm:$0xf]
    %v557 = vld [vmem:[%s545 + $0x2c] sm:$0xf]
    %v558 = vld [vmem:[%s545 + $0x30] sm:$0xf]
    %v559 = vld [vmem:[%s545 + $0x34] sm:$0xf]
    %v560 = vld [vmem:[%s545 + $0x38] sm:$0xf]
    %v561 = vld [vmem:[%s545 + $0x3c] sm:$0xf]
    %v562 = vpack.c.bf16 %v486, %v483
    %v563 = vpack.c.bf16 %v494, %v491
    %v564 = vpack.c.bf16 %v502, %v499
    %v565 = vpack.c.bf16 %v510, %v507
    %v566 = vpack.c.bf16 %v518, %v515
    %v567 = vpack.c.bf16 %v526, %v523
    %v568 = vpack.c.bf16 %v534, %v531
    %v569 = vpack.c.bf16 %v542, %v539
    %v570 = vld [vmem:[#allocation8 + $0x1] sm:$0x1]
    %v571 = vlaneseq
    %v572 = vshrl.u32 %v571, 7
    %v573 = vsub.s32 0, %v572
    %v574 = vrot.slane %v570, %v573
    %v591 = vunpack.c.l.b16 %v546
    %v592 = vunpack.c.l.b16 %v547
    %v593 = vunpack.c.l.b16 %v548
    %v594 = vunpack.c.l.b16 %v549
    %v595 = vunpack.c.l.b16 %v550
    %v596 = vunpack.c.l.b16 %v551
    %v597 = vunpack.c.l.b16 %v552
    %v598 = vunpack.c.l.b16 %v553
    %v599 = vunpack.c.l.b16 %v554
    %v600 = vunpack.c.l.b16 %v555
    %v601 = vunpack.c.l.b16 %v556
    %v602 = vunpack.c.l.b16 %v557
    %v603 = vunpack.c.l.b16 %v558
    %v604 = vunpack.c.l.b16 %v559
    %v605 = vunpack.c.l.b16 %v560
    %v606 = vunpack.c.l.b16 %v561
    %v607 = vpack.c.b16 %v592, %v591
    %v608 = vpack.c.b16 %v594, %v593
    %v609 = vpack.c.b16 %v596, %v595
    %v610 = vpack.c.b16 %v598, %v597
    %v611 = vpack.c.b16 %v600, %v599
    %v612 = vpack.c.b16 %v602, %v601
    %v613 = vpack.c.b16 %v604, %v603
    %v614 = vpack.c.b16 %v606, %v605
    %623 = vmatprep.subr.bf16.mxu0 0
    %624 = vmatpush1.bf16.msra.mxu0 %v614
    %625 = vmatprep.subr.bf16.mxu0 0
    %626 = vmatpush1.bf16.msra.mxu0 %v613
    %627 = vmatprep.subr.bf16.mxu0 0
    %628 = vmatpush1.bf16.msra.mxu0 %v612
    %629 = vmatprep.subr.bf16.mxu0 0
    %630 = vmatpush1.bf16.msra.mxu0 %v611
    %631 = vmatprep.subr.bf16.mxu0 0
    %632 = vmatpush1.bf16.msra.mxu0 %v610
    %633 = vmatprep.subr.bf16.mxu0 0
    %634 = vmatpush1.bf16.msra.mxu0 %v609
    %635 = vmatprep.subr.bf16.mxu0 0
    %636 = vmatpush1.bf16.msra.mxu0 %v608
    %637 = vmatprep.subr.bf16.mxu0 0
    %638 = vmatpush1.bf16.msra.mxu0 %v607
    %639 = vmatprep.subr.bf16.mxu0 0
    %640 = vmatpush2.bf16.msra.mxu0 0
    %641 = vmatprep.subr.bf16.mxu0 0
    %642 = vmatpush2.bf16.msra.mxu0 0
    %643 = vmatprep.subr.bf16.mxu0 0
    %644 = vmatpush2.bf16.msra.mxu0 0
    %645 = vmatprep.subr.bf16.mxu0 0
    %646 = vmatpush2.bf16.msra.mxu0 0
    %647 = vmatprep.subr.bf16.mxu0 0
    %648 = vmatpush2.bf16.msra.mxu0 0
    %649 = vmatprep.subr.bf16.mxu0 0
    %650 = vmatpush2.bf16.msra.mxu0 0
    %651 = vmatprep.subr.bf16.mxu0 0
    %652 = vmatpush2.bf16.msra.mxu0 0
    %653 = vmatprep.subr.bf16.mxu0 0
    %654 = vmatpush2.bf16.msra.mxu0 0
    %655 = vmatprep.mubr.bf16.mxu0 0
    %656 = vmatmul.mubr.bf16.gmra.mxu0 %v562
    %v657 = vpop.f32.mrf.mxu0
    %v658 = vadd.f32 %v574, %v657
    %v659 = vpop.f32.mrf.mxu0
    %v660 = vpop.f32.mrf.mxu0
    %v661 = vadd.f32 %v574, %v660
    %v662 = vpop.f32.mrf.mxu0
    %663 = vmatprep.mubr.bf16.mxu0 0
    %664 = vmatmul.mubr.bf16.gmra.mxu0 %v563
    %v665 = vpop.f32.mrf.mxu0
    %v666 = vadd.f32 %v574, %v665
    %v667 = vpop.f32.mrf.mxu0
    %v668 = vpop.f32.mrf.mxu0
    %v669 = vadd.f32 %v574, %v668
    %v670 = vpop.f32.mrf.mxu0
    %671 = vmatprep.mubr.bf16.mxu0 0
    %672 = vmatmul.mubr.bf16.gmra.mxu0 %v564
    %v673 = vpop.f32.mrf.mxu0
    %v674 = vadd.f32 %v574, %v673
    %v675 = vpop.f32.mrf.mxu0
    %v676 = vpop.f32.mrf.mxu0
    %v677 = vadd.f32 %v574, %v676
    %v678 = vpop.f32.mrf.mxu0
    %679 = vmatprep.mubr.bf16.mxu0 0
    %680 = vmatmul.mubr.bf16.gmra.mxu0 %v565
    %v681 = vpop.f32.mrf.mxu0
    %v682 = vadd.f32 %v574, %v681
    %v683 = vpop.f32.mrf.mxu0
    %v684 = vpop.f32.mrf.mxu0
    %v685 = vadd.f32 %v574, %v684
    %v686 = vpop.f32.mrf.mxu0
    %687 = vmatprep.mubr.bf16.mxu0 0
    %688 = vmatmul.mubr.bf16.gmra.mxu0 %v566
    %v689 = vpop.f32.mrf.mxu0
    %v690 = vadd.f32 %v574, %v689
    %v691 = vpop.f32.mrf.mxu0
    %v692 = vpop.f32.mrf.mxu0
    %v693 = vadd.f32 %v574, %v692
    %v694 = vpop.f32.mrf.mxu0
    %695 = vmatprep.mubr.bf16.mxu0 0
    %696 = vmatmul.mubr.bf16.gmra.mxu0 %v567
    %v697 = vpop.f32.mrf.mxu0
    %v698 = vadd.f32 %v574, %v697
    %v699 = vpop.f32.mrf.mxu0
    %v700 = vpop.f32.mrf.mxu0
    %v701 = vadd.f32 %v574, %v700
    %v702 = vpop.f32.mrf.mxu0
    %703 = vmatprep.mubr.bf16.mxu0 0
    %704 = vmatmul.mubr.bf16.gmra.mxu0 %v568
    %v705 = vpop.f32.mrf.mxu0
    %v706 = vadd.f32 %v574, %v705
    %v707 = vpop.f32.mrf.mxu0
    %v708 = vpop.f32.mrf.mxu0
    %v709 = vadd.f32 %v574, %v708
    %v710 = vpop.f32.mrf.mxu0
    %711 = vmatprep.mubr.bf16.mxu0 0
    %712 = vmatmul.mubr.bf16.gmra.mxu0 %v569
    %v713 = vpop.f32.mrf.mxu0
    %v714 = vadd.f32 %v574, %v713
    %v715 = vpop.f32.mrf.mxu0
    %v716 = vpop.f32.mrf.mxu0
    %v717 = vadd.f32 %v574, %v716
    %v718 = vpop.f32.mrf.mxu0
    %719 = vdwg.mxu0
    %v720 = vmax.f32 %v658, 0.0
    %v721 = vmax.f32 %v661, 0.0
    %v722 = vmax.f32 %v666, 0.0
    %v723 = vmax.f32 %v669, 0.0
    %v724 = vmax.f32 %v674, 0.0
    %v725 = vmax.f32 %v677, 0.0
    %v726 = vmax.f32 %v682, 0.0
    %v727 = vmax.f32 %v685, 0.0
    %v728 = vmax.f32 %v690, 0.0
    %v729 = vmax.f32 %v693, 0.0
    %v730 = vmax.f32 %v698, 0.0
    %v731 = vmax.f32 %v701, 0.0
    %v732 = vmax.f32 %v706, 0.0
    %v733 = vmax.f32 %v709, 0.0
    %v734 = vmax.f32 %v714, 0.0
    %v735 = vmax.f32 %v717, 0.0
    %v736 = vadd.f32 %v720, %v330
    %v737 = vadd.f32 %v721, %v333
    %v738 = vadd.f32 %v722, %v338
    %v739 = vadd.f32 %v723, %v341
    %v740 = vadd.f32 %v724, %v346
    %v741 = vadd.f32 %v725, %v349
    %v742 = vadd.f32 %v726, %v354
    %v743 = vadd.f32 %v727, %v357
    %v744 = vadd.f32 %v728, %v362
    %v745 = vadd.f32 %v729, %v365
    %v746 = vadd.f32 %v730, %v370
    %v747 = vadd.f32 %v731, %v373
    %v748 = vadd.f32 %v732, %v378
    %v749 = vadd.f32 %v733, %v381
    %v750 = vadd.f32 %v734, %v386
    %v751 = vadd.f32 %v735, %v389
    %v752 = vpack.c.bf16 %v737, %v736
    %v753 = vpack.c.bf16 %v739, %v738
    %v754 = vpack.c.bf16 %v741, %v740
    %v755 = vpack.c.bf16 %v743, %v742
    %v756 = vpack.c.bf16 %v745, %v744
    %v757 = vpack.c.bf16 %v747, %v746
    %v758 = vpack.c.bf16 %v749, %v748
    %v759 = vpack.c.bf16 %v751, %v750
    %760 = vmatprep.subr.bf16.mxu0 0
    %761 = vmatpush1.bf16.msra.mxu0 %v759
    %762 = vmatprep.subr.bf16.mxu0 0
    %763 = vmatpush1.bf16.msra.mxu0 %v758
    %764 = vmatprep.subr.bf16.mxu0 0
    %765 = vmatpush1.bf16.msra.mxu0 %v757
    %766 = vmatprep.subr.bf16.mxu0 0
    %767 = vmatpush1.bf16.msra.mxu0 %v756
    %768 = vmatprep.subr.bf16.mxu0 0
    %769 = vmatpush1.bf16.msra.mxu0 %v755
    %770 = vmatprep.subr.bf16.mxu0 0
    %771 = vmatpush1.bf16.msra.mxu0 %v754
    %772 = vmatprep.subr.bf16.mxu0 0
    %773 = vmatpush1.bf16.msra.mxu0 %v753
    %774 = vmatprep.subr.bf16.mxu0 0
    %775 = vmatpush1.bf16.msra.mxu0 %v752
    %776 = vmatprep.subr.bf16.mxu0 0
    %777 = vmatpush2.bf16.msra.mxu0 0
    %778 = vmatprep.subr.bf16.mxu0 0
    %779 = vmatpush2.bf16.msra.mxu0 0
    %780 = vmatprep.subr.bf16.mxu0 0
    %781 = vmatpush2.bf16.msra.mxu0 0
    %782 = vmatprep.subr.bf16.mxu0 0
    %783 = vmatpush2.bf16.msra.mxu0 0
    %784 = vmatprep.subr.bf16.mxu0 0
    %785 = vmatpush2.bf16.msra.mxu0 0
    %786 = vmatprep.subr.bf16.mxu0 0
    %787 = vmatpush2.bf16.msra.mxu0 0
    %788 = vmatprep.subr.bf16.mxu0 0
    %789 = vmatpush2.bf16.msra.mxu0 0
    %790 = vmatprep.subr.bf16.mxu0 0
    %791 = vmatpush2.bf16.msra.mxu0 0
    %792 = vmatprep.mubr.bf16.mxu0 0
    %793 = vmatmul.mubr.bf16.gmra.mxu0 %v432
    %v794 = vpop.f32.mrf.mxu0
    %v795 = vadd.f32 0.0, %v794
    %v796 = vpop.f32.mrf.mxu0
    %v797 = vpop.f32.mrf.mxu0
    %v798 = vadd.f32 0.0, %v797
    %v799 = vpop.f32.mrf.mxu0
    %800 = vmatprep.mubr.bf16.mxu0 0
    %801 = vmatmul.mubr.bf16.gmra.mxu0 %v433
    %v802 = vpop.f32.mrf.mxu0
    %v803 = vadd.f32 0.0, %v802
    %v804 = vpop.f32.mrf.mxu0
    %v805 = vpop.f32.mrf.mxu0
    %v806 = vadd.f32 0.0, %v805
    %v807 = vpop.f32.mrf.mxu0
    %808 = vmatprep.mubr.bf16.mxu0 0
    %809 = vmatmul.mubr.bf16.gmra.mxu0 %v434
    %v810 = vpop.f32.mrf.mxu0
    %v811 = vadd.f32 0.0, %v810
    %v812 = vpop.f32.mrf.mxu0
    %v813 = vpop.f32.mrf.mxu0
    %v814 = vadd.f32 0.0, %v813
    %v815 = vpop.f32.mrf.mxu0
    %816 = vmatprep.mubr.bf16.mxu0 0
    %817 = vmatmul.mubr.bf16.gmra.mxu0 %v435
    %v818 = vpop.f32.mrf.mxu0
    %v819 = vadd.f32 0.0, %v818
    %v820 = vpop.f32.mrf.mxu0
    %v821 = vpop.f32.mrf.mxu0
    %v822 = vadd.f32 0.0, %v821
    %v823 = vpop.f32.mrf.mxu0
    %824 = vmatprep.mubr.bf16.mxu0 0
    %825 = vmatmul.mubr.bf16.gmra.mxu0 %v436
    %v826 = vpop.f32.mrf.mxu0
    %v827 = vadd.f32 0.0, %v826
    %v828 = vpop.f32.mrf.mxu0
    %v829 = vpop.f32.mrf.mxu0
    %v830 = vadd.f32 0.0, %v829
    %v831 = vpop.f32.mrf.mxu0
    %832 = vmatprep.mubr.bf16.mxu0 0
    %833 = vmatmul.mubr.bf16.gmra.mxu0 %v437
    %v834 = vpop.f32.mrf.mxu0
    %v835 = vadd.f32 0.0, %v834
    %v836 = vpop.f32.mrf.mxu0
    %v837 = vpop.f32.mrf.mxu0
    %v838 = vadd.f32 0.0, %v837
    %v839 = vpop.f32.mrf.mxu0
    %840 = vmatprep.mubr.bf16.mxu0 0
    %841 = vmatmul.mubr.bf16.gmra.mxu0 %v438
    %v842 = vpop.f32.mrf.mxu0
    %v843 = vadd.f32 0.0, %v842
    %v844 = vpop.f32.mrf.mxu0
    %v845 = vpop.f32.mrf.mxu0
    %v846 = vadd.f32 0.0, %v845
    %v847 = vpop.f32.mrf.mxu0
    %848 = vmatprep.mubr.bf16.mxu0 0
    %849 = vmatmul.mubr.bf16.gmra.mxu0 %v439
    %v850 = vpop.f32.mrf.mxu0
    %v851 = vadd.f32 0.0, %v850
    %v852 = vpop.f32.mrf.mxu0
    %v853 = vpop.f32.mrf.mxu0
    %v854 = vadd.f32 0.0, %v853
    %v855 = vpop.f32.mrf.mxu0
    %856 = vdwg.mxu0
    %s857 = scalar_lea.vmem [#allocation7], 128
    %v858 = vld [vmem:[%s857] sm:$0xf]
    %v859 = vld [vmem:[%s857 + $0x4] sm:$0xf]
    %v860 = vld [vmem:[%s857 + $0x8] sm:$0xf]
    %v861 = vld [vmem:[%s857 + $0xc] sm:$0xf]
    %v862 = vld [vmem:[%s857 + $0x10] sm:$0xf]
    %v863 = vld [vmem:[%s857 + $0x14] sm:$0xf]
    %v864 = vld [vmem:[%s857 + $0x18] sm:$0xf]
    %v865 = vld [vmem:[%s857 + $0x1c] sm:$0xf]
    %v866 = vld [vmem:[%s857 + $0x20] sm:$0xf]
    %v867 = vld [vmem:[%s857 + $0x24] sm:$0xf]
    %v868 = vld [vmem:[%s857 + $0x28] sm:$0xf]
    %v869 = vld [vmem:[%s857 + $0x2c] sm:$0xf]
    %v870 = vld [vmem:[%s857 + $0x30] sm:$0xf]
    %v871 = vld [vmem:[%s857 + $0x34] sm:$0xf]
    %v872 = vld [vmem:[%s857 + $0x38] sm:$0xf]
    %v873 = vld [vmem:[%s857 + $0x3c] sm:$0xf]
    %v874 = vpack.c.bf16 %v798, %v795
    %v875 = vpack.c.bf16 %v806, %v803
    %v876 = vpack.c.bf16 %v814, %v811
    %v877 = vpack.c.bf16 %v822, %v819
    %v878 = vpack.c.bf16 %v830, %v827
    %v879 = vpack.c.bf16 %v838, %v835
    %v880 = vpack.c.bf16 %v846, %v843
    %v881 = vpack.c.bf16 %v854, %v851
    %v882 = vld [vmem:[#allocation8 + $0x2] sm:$0x1]
    %v883 = vlaneseq
    %v884 = vshrl.u32 %v883, 7
    %v885 = vsub.s32 0, %v884
    %v886 = vrot.slane %v882, %v885
    %v903 = vunpack.c.l.b16 %v858
    %v904 = vunpack.c.l.b16 %v859
    %v905 = vunpack.c.l.b16 %v860
    %v906 = vunpack.c.l.b16 %v861
    %v907 = vunpack.c.l.b16 %v862
    %v908 = vunpack.c.l.b16 %v863
    %v909 = vunpack.c.l.b16 %v864
    %v910 = vunpack.c.l.b16 %v865
    %v911 = vunpack.c.l.b16 %v866
    %v912 = vunpack.c.l.b16 %v867
    %v913 = vunpack.c.l.b16 %v868
    %v914 = vunpack.c.l.b16 %v869
    %v915 = vunpack.c.l.b16 %v870
    %v916 = vunpack.c.l.b16 %v871
    %v917 = vunpack.c.l.b16 %v872
    %v918 = vunpack.c.l.b16 %v873
    %v919 = vpack.c.b16 %v904, %v903
    %v920 = vpack.c.b16 %v906, %v905
    %v921 = vpack.c.b16 %v908, %v907
    %v922 = vpack.c.b16 %v910, %v909
    %v923 = vpack.c.b16 %v912, %v911
    %v924 = vpack.c.b16 %v914, %v913
    %v925 = vpack.c.b16 %v916, %v915
    %v926 = vpack.c.b16 %v918, %v917
    %935 = vmatprep.subr.bf16.mxu0 0
    %936 = vmatpush1.bf16.msra.mxu0 %v926
    %937 = vmatprep.subr.bf16.mxu0 0
    %938 = vmatpush1.bf16.msra.mxu0 %v925
    %939 = vmatprep.subr.bf16.mxu0 0
    %940 = vmatpush1.bf16.msra.mxu0 %v924
    %941 = vmatprep.subr.bf16.mxu0 0
    %942 = vmatpush1.bf16.msra.mxu0 %v923
    %943 = vmatprep.subr.bf16.mxu0 0
    %944 = vmatpush1.bf16.msra.mxu0 %v922
    %945 = vmatprep.subr.bf16.mxu0 0
    %946 = vmatpush1.bf16.msra.mxu0 %v921
    %947 = vmatprep.subr.bf16.mxu0 0
    %948 = vmatpush1.bf16.msra.mxu0 %v920
    %949 = vmatprep.subr.bf16.mxu0 0
    %950 = vmatpush1.bf16.msra.mxu0 %v919
    %951 = vmatprep.subr.bf16.mxu0 0
    %952 = vmatpush2.bf16.msra.mxu0 0
    %953 = vmatprep.subr.bf16.mxu0 0
    %954 = vmatpush2.bf16.msra.mxu0 0
    %955 = vmatprep.subr.bf16.mxu0 0
    %956 = vmatpush2.bf16.msra.mxu0 0
    %957 = vmatprep.subr.bf16.mxu0 0
    %958 = vmatpush2.bf16.msra.mxu0 0
    %959 = vmatprep.subr.bf16.mxu0 0
    %960 = vmatpush2.bf16.msra.mxu0 0
    %961 = vmatprep.subr.bf16.mxu0 0
    %962 = vmatpush2.bf16.msra.mxu0 0
    %963 = vmatprep.subr.bf16.mxu0 0
    %964 = vmatpush2.bf16.msra.mxu0 0
    %965 = vmatprep.subr.bf16.mxu0 0
    %966 = vmatpush2.bf16.msra.mxu0 0
    %967 = vmatprep.mubr.bf16.mxu0 0
    %968 = vmatmul.mubr.bf16.gmra.mxu0 %v874
    %v969 = vpop.f32.mrf.mxu0
    %v970 = vadd.f32 %v886, %v969
    %v971 = vpop.f32.mrf.mxu0
    %v972 = vpop.f32.mrf.mxu0
    %v973 = vadd.f32 %v886, %v972
    %v974 = vpop.f32.mrf.mxu0
    %975 = vmatprep.mubr.bf16.mxu0 0
    %976 = vmatmul.mubr.bf16.gmra.mxu0 %v875
    %v977 = vpop.f32.mrf.mxu0
    %v978 = vadd.f32 %v886, %v977
    %v979 = vpop.f32.mrf.mxu0
    %v980 = vpop.f32.mrf.mxu0
    %v981 = vadd.f32 %v886, %v980
    %v982 = vpop.f32.mrf.mxu0
    %983 = vmatprep.mubr.bf16.mxu0 0
    %984 = vmatmul.mubr.bf16.gmra.mxu0 %v876
    %v985 = vpop.f32.mrf.mxu0
    %v986 = vadd.f32 %v886, %v985
    %v987 = vpop.f32.mrf.mxu0
    %v988 = vpop.f32.mrf.mxu0
    %v989 = vadd.f32 %v886, %v988
    %v990 = vpop.f32.mrf.mxu0
    %991 = vmatprep.mubr.bf16.mxu0 0
    %992 = vmatmul.mubr.bf16.gmra.mxu0 %v877
    %v993 = vpop.f32.mrf.mxu0
    %v994 = vadd.f32 %v886, %v993
    %v995 = vpop.f32.mrf.mxu0
    %v996 = vpop.f32.mrf.mxu0
    %v997 = vadd.f32 %v886, %v996
    %v998 = vpop.f32.mrf.mxu0
    %999 = vmatprep.mubr.bf16.mxu0 0
    %1000 = vmatmul.mubr.bf16.gmra.mxu0 %v878
    %v1001 = vpop.f32.mrf.mxu0
    %v1002 = vadd.f32 %v886, %v1001
    %v1003 = vpop.f32.mrf.mxu0
    %v1004 = vpop.f32.mrf.mxu0
    %v1005 = vadd.f32 %v886, %v1004
    %v1006 = vpop.f32.mrf.mxu0
    %1007 = vmatprep.mubr.bf16.mxu0 0
    %1008 = vmatmul.mubr.bf16.gmra.mxu0 %v879
    %v1009 = vpop.f32.mrf.mxu0
    %v1010 = vadd.f32 %v886, %v1009
    %v1011 = vpop.f32.mrf.mxu0
    %v1012 = vpop.f32.mrf.mxu0
    %v1013 = vadd.f32 %v886, %v1012
    %v1014 = vpop.f32.mrf.mxu0
    %1015 = vmatprep.mubr.bf16.mxu0 0
    %1016 = vmatmul.mubr.bf16.gmra.mxu0 %v880
    %v1017 = vpop.f32.mrf.mxu0
    %v1018 = vadd.f32 %v886, %v1017
    %v1019 = vpop.f32.mrf.mxu0
    %v1020 = vpop.f32.mrf.mxu0
    %v1021 = vadd.f32 %v886, %v1020
    %v1022 = vpop.f32.mrf.mxu0
    %1023 = vmatprep.mubr.bf16.mxu0 0
    %1024 = vmatmul.mubr.bf16.gmra.mxu0 %v881
    %v1025 = vpop.f32.mrf.mxu0
    %v1026 = vadd.f32 %v886, %v1025
    %v1027 = vpop.f32.mrf.mxu0
    %v1028 = vpop.f32.mrf.mxu0
    %v1029 = vadd.f32 %v886, %v1028
    %v1030 = vpop.f32.mrf.mxu0
    %1031 = vdwg.mxu0
    %v1032 = vmax.f32 %v970, 0.0
    %v1033 = vmax.f32 %v973, 0.0
    %v1034 = vmax.f32 %v978, 0.0
    %v1035 = vmax.f32 %v981, 0.0
    %v1036 = vmax.f32 %v986, 0.0
    %v1037 = vmax.f32 %v989, 0.0
    %v1038 = vmax.f32 %v994, 0.0
    %v1039 = vmax.f32 %v997, 0.0
    %v1040 = vmax.f32 %v1002, 0.0
    %v1041 = vmax.f32 %v1005, 0.0
    %v1042 = vmax.f32 %v1010, 0.0
    %v1043 = vmax.f32 %v1013, 0.0
    %v1044 = vmax.f32 %v1018, 0.0
    %v1045 = vmax.f32 %v1021, 0.0
    %v1046 = vmax.f32 %v1026, 0.0
    %v1047 = vmax.f32 %v1029, 0.0
    %v1048 = vadd.f32 %v1032, %v736
    %v1049 = vadd.f32 %v1033, %v737
    %v1050 = vadd.f32 %v1034, %v738
    %v1051 = vadd.f32 %v1035, %v739
    %v1052 = vadd.f32 %v1036, %v740
    %v1053 = vadd.f32 %v1037, %v741
    %v1054 = vadd.f32 %v1038, %v742
    %v1055 = vadd.f32 %v1039, %v743
    %v1056 = vadd.f32 %v1040, %v744
    %v1057 = vadd.f32 %v1041, %v745
    %v1058 = vadd.f32 %v1042, %v746
    %v1059 = vadd.f32 %v1043, %v747
    %v1060 = vadd.f32 %v1044, %v748
    %v1061 = vadd.f32 %v1045, %v749
    %v1062 = vadd.f32 %v1046, %v750
    %v1063 = vadd.f32 %v1047, %v751
    %s1064 = scalar_lea.vmem [#allocation7], 320
    %v1065 = vld [vmem:[%s1064] sm:$0xf]
    %v1066 = vld [vmem:[%s1064 + $0x4] sm:$0xf]
    %v1067 = vld [vmem:[%s1064 + $0x8] sm:$0xf]
    %v1068 = vld [vmem:[%s1064 + $0xc] sm:$0xf]
    %v1069 = vld [vmem:[%s1064 + $0x10] sm:$0xf]
    %v1070 = vld [vmem:[%s1064 + $0x14] sm:$0xf]
    %v1071 = vld [vmem:[%s1064 + $0x18] sm:$0xf]
    %v1072 = vld [vmem:[%s1064 + $0x1c] sm:$0xf]
    %v1073 = vld [vmem:[%s1064 + $0x20] sm:$0xf]
    %v1074 = vld [vmem:[%s1064 + $0x24] sm:$0xf]
    %v1075 = vld [vmem:[%s1064 + $0x28] sm:$0xf]
    %v1076 = vld [vmem:[%s1064 + $0x2c] sm:$0xf]
    %v1077 = vld [vmem:[%s1064 + $0x30] sm:$0xf]
    %v1078 = vld [vmem:[%s1064 + $0x34] sm:$0xf]
    %v1079 = vld [vmem:[%s1064 + $0x38] sm:$0xf]
    %v1080 = vld [vmem:[%s1064 + $0x3c] sm:$0xf]
    %v1081 = vld [vmem:[#allocation8 + $0x5] sm:$0x1]
    %v1082 = vlaneseq
    %v1083 = vshrl.u32 %v1082, 7
    %v1084 = vsub.s32 0, %v1083
    %v1085 = vrot.slane %v1081, %v1084
    %v1102 = vunpack.c.l.b16 %v1065
    %v1103 = vunpack.c.l.b16 %v1066
    %v1104 = vunpack.c.l.b16 %v1067
    %v1105 = vunpack.c.l.b16 %v1068
    %v1106 = vunpack.c.l.b16 %v1069
    %v1107 = vunpack.c.l.b16 %v1070
    %v1108 = vunpack.c.l.b16 %v1071
    %v1109 = vunpack.c.l.b16 %v1072
    %v1110 = vunpack.c.l.b16 %v1073
    %v1111 = vunpack.c.l.b16 %v1074
    %v1112 = vunpack.c.l.b16 %v1075
    %v1113 = vunpack.c.l.b16 %v1076
    %v1114 = vunpack.c.l.b16 %v1077
    %v1115 = vunpack.c.l.b16 %v1078
    %v1116 = vunpack.c.l.b16 %v1079
    %v1117 = vunpack.c.l.b16 %v1080
    %v1118 = vpack.c.b16 %v1103, %v1102
    %v1119 = vpack.c.b16 %v1105, %v1104
    %v1120 = vpack.c.b16 %v1107, %v1106
    %v1121 = vpack.c.b16 %v1109, %v1108
    %v1122 = vpack.c.b16 %v1111, %v1110
    %v1123 = vpack.c.b16 %v1113, %v1112
    %v1124 = vpack.c.b16 %v1115, %v1114
    %v1125 = vpack.c.b16 %v1117, %v1116
    %1134 = vmatprep.subr.bf16.mxu0 0
    %1135 = vmatpush1.bf16.msra.mxu0 %v1125
    %1136 = vmatprep.subr.bf16.mxu0 0
    %1137 = vmatpush1.bf16.msra.mxu0 %v1124
    %1138 = vmatprep.subr.bf16.mxu0 0
    %1139 = vmatpush1.bf16.msra.mxu0 %v1123
    %1140 = vmatprep.subr.bf16.mxu0 0
    %1141 = vmatpush1.bf16.msra.mxu0 %v1122
    %1142 = vmatprep.subr.bf16.mxu0 0
    %1143 = vmatpush1.bf16.msra.mxu0 %v1121
    %1144 = vmatprep.subr.bf16.mxu0 0
    %1145 = vmatpush1.bf16.msra.mxu0 %v1120
    %1146 = vmatprep.subr.bf16.mxu0 0
    %1147 = vmatpush1.bf16.msra.mxu0 %v1119
    %1148 = vmatprep.subr.bf16.mxu0 0
    %1149 = vmatpush1.bf16.msra.mxu0 %v1118
    %1150 = vmatprep.subr.bf16.mxu0 0
    %1151 = vmatpush2.bf16.msra.mxu0 0
    %1152 = vmatprep.subr.bf16.mxu0 0
    %1153 = vmatpush2.bf16.msra.mxu0 0
    %1154 = vmatprep.subr.bf16.mxu0 0
    %1155 = vmatpush2.bf16.msra.mxu0 0
    %1156 = vmatprep.subr.bf16.mxu0 0
    %1157 = vmatpush2.bf16.msra.mxu0 0
    %1158 = vmatprep.subr.bf16.mxu0 0
    %1159 = vmatpush2.bf16.msra.mxu0 0
    %1160 = vmatprep.subr.bf16.mxu0 0
    %1161 = vmatpush2.bf16.msra.mxu0 0
    %1162 = vmatprep.subr.bf16.mxu0 0
    %1163 = vmatpush2.bf16.msra.mxu0 0
    %1164 = vmatprep.subr.bf16.mxu0 0
    %1165 = vmatpush2.bf16.msra.mxu0 0
    %1166 = vmatprep.mubr.bf16.mxu0 0
    %1167 = vmatmul.mubr.bf16.gmra.mxu0 %v874
    %v1168 = vpop.f32.mrf.mxu0
    %v1169 = vadd.f32 %v1085, %v1168
    %v1170 = vpop.f32.mrf.mxu0
    %v1171 = vpop.f32.mrf.mxu0
    %v1172 = vadd.f32 %v1085, %v1171
    %v1173 = vpop.f32.mrf.mxu0
    %1174 = vmatprep.mubr.bf16.mxu0 0
    %1175 = vmatmul.mubr.bf16.gmra.mxu0 %v875
    %v1176 = vpop.f32.mrf.mxu0
    %v1177 = vadd.f32 %v1085, %v1176
    %v1178 = vpop.f32.mrf.mxu0
    %v1179 = vpop.f32.mrf.mxu0
    %v1180 = vadd.f32 %v1085, %v1179
    %v1181 = vpop.f32.mrf.mxu0
    %1182 = vmatprep.mubr.bf16.mxu0 0
    %1183 = vmatmul.mubr.bf16.gmra.mxu0 %v876
    %v1184 = vpop.f32.mrf.mxu0
    %v1185 = vadd.f32 %v1085, %v1184
    %v1186 = vpop.f32.mrf.mxu0
    %v1187 = vpop.f32.mrf.mxu0
    %v1188 = vadd.f32 %v1085, %v1187
    %v1189 = vpop.f32.mrf.mxu0
    %1190 = vmatprep.mubr.bf16.mxu0 0
    %1191 = vmatmul.mubr.bf16.gmra.mxu0 %v877
    %v1192 = vpop.f32.mrf.mxu0
    %v1193 = vadd.f32 %v1085, %v1192
    %v1194 = vpop.f32.mrf.mxu0
    %v1195 = vpop.f32.mrf.mxu0
    %v1196 = vadd.f32 %v1085, %v1195
    %v1197 = vpop.f32.mrf.mxu0
    %1198 = vmatprep.mubr.bf16.mxu0 0
    %1199 = vmatmul.mubr.bf16.gmra.mxu0 %v878
    %v1200 = vpop.f32.mrf.mxu0
    %v1201 = vadd.f32 %v1085, %v1200
    %v1202 = vpop.f32.mrf.mxu0
    %v1203 = vpop.f32.mrf.mxu0
    %v1204 = vadd.f32 %v1085, %v1203
    %v1205 = vpop.f32.mrf.mxu0
    %1206 = vmatprep.mubr.bf16.mxu0 0
    %1207 = vmatmul.mubr.bf16.gmra.mxu0 %v879
    %v1208 = vpop.f32.mrf.mxu0
    %v1209 = vadd.f32 %v1085, %v1208
    %v1210 = vpop.f32.mrf.mxu0
    %v1211 = vpop.f32.mrf.mxu0
    %v1212 = vadd.f32 %v1085, %v1211
    %v1213 = vpop.f32.mrf.mxu0
    %1214 = vmatprep.mubr.bf16.mxu0 0
    %1215 = vmatmul.mubr.bf16.gmra.mxu0 %v880
    %v1216 = vpop.f32.mrf.mxu0
    %v1217 = vadd.f32 %v1085, %v1216
    %v1218 = vpop.f32.mrf.mxu0
    %v1219 = vpop.f32.mrf.mxu0
    %v1220 = vadd.f32 %v1085, %v1219
    %v1221 = vpop.f32.mrf.mxu0
    %1222 = vmatprep.mubr.bf16.mxu0 0
    %1223 = vmatmul.mubr.bf16.gmra.mxu0 %v881
    %v1224 = vpop.f32.mrf.mxu0
    %v1225 = vadd.f32 %v1085, %v1224
    %v1226 = vpop.f32.mrf.mxu0
    %v1227 = vpop.f32.mrf.mxu0
    %v1228 = vadd.f32 %v1085, %v1227
    %v1229 = vpop.f32.mrf.mxu0
    %1230 = vdwg.mxu0
    %1231 = vmax.xlane.f32.xlu0 %v1169
    %v1232 = vpop.xlane.xlu0 %1231
    %1233 = vmax.xlane.f32.xlu0 %v1172
    %v1234 = vpop.xlane.xlu0 %1233
    %1235 = vmax.xlane.f32.xlu0 %v1177
    %v1236 = vpop.xlane.xlu0 %1235
    %1237 = vmax.xlane.f32.xlu0 %v1180
    %v1238 = vpop.xlane.xlu0 %1237
    %1239 = vmax.xlane.f32.xlu0 %v1185
    %v1240 = vpop.xlane.xlu0 %1239
    %1241 = vmax.xlane.f32.xlu0 %v1188
    %v1242 = vpop.xlane.xlu0 %1241
    %1243 = vmax.xlane.f32.xlu0 %v1193
    %v1244 = vpop.xlane.xlu0 %1243
    %1245 = vmax.xlane.f32.xlu0 %v1196
    %v1246 = vpop.xlane.xlu0 %1245
    %1247 = vmax.xlane.f32.xlu0 %v1201
    %v1248 = vpop.xlane.xlu0 %1247
    %1249 = vmax.xlane.f32.xlu0 %v1204
    %v1250 = vpop.xlane.xlu0 %1249
    %1251 = vmax.xlane.f32.xlu0 %v1209
    %v1252 = vpop.xlane.xlu0 %1251
    %1253 = vmax.xlane.f32.xlu0 %v1212
    %v1254 = vpop.xlane.xlu0 %1253
    %1255 = vmax.xlane.f32.xlu0 %v1217
    %v1256 = vpop.xlane.xlu0 %1255
    %1257 = vmax.xlane.f32.xlu0 %v1220
    %v1258 = vpop.xlane.xlu0 %1257
    %1259 = vmax.xlane.f32.xlu0 %v1225
    %v1260 = vpop.xlane.xlu0 %1259
    %1261 = vmax.xlane.f32.xlu0 %v1228
    %v1262 = vpop.xlane.xlu0 %1261
    %v1263 = vsub.f32 %v1169, %v1232
    %v1264 = vsub.f32 %v1172, %v1234
    %v1265 = vsub.f32 %v1177, %v1236
    %v1266 = vsub.f32 %v1180, %v1238
    %v1267 = vsub.f32 %v1185, %v1240
    %v1268 = vsub.f32 %v1188, %v1242
    %v1269 = vsub.f32 %v1193, %v1244
    %v1270 = vsub.f32 %v1196, %v1246
    %v1271 = vsub.f32 %v1201, %v1248
    %v1272 = vsub.f32 %v1204, %v1250
    %v1273 = vsub.f32 %v1209, %v1252
    %v1274 = vsub.f32 %v1212, %v1254
    %v1275 = vsub.f32 %v1217, %v1256
    %v1276 = vsub.f32 %v1220, %v1258
    %v1277 = vsub.f32 %v1225, %v1260
    %v1278 = vsub.f32 %v1228, %v1262
    %v1279 = vmul.f32 %v1263, 1.442695
    %v1280 = vpow.pop %v1279
    %v1281 = vmul.f32 %v1264, 1.442695
    %v1282 = vpow.pop %v1281
    %v1283 = vmul.f32 %v1265, 1.442695
    %v1284 = vpow.pop %v1283
    %v1285 = vmul.f32 %v1266, 1.442695
    %v1286 = vpow.pop %v1285
    %v1287 = vmul.f32 %v1267, 1.442695
    %v1288 = vpow.pop %v1287
    %v1289 = vmul.f32 %v1268, 1.442695
    %v1290 = vpow.pop %v1289
    %v1291 = vmul.f32 %v1269, 1.442695
    %v1292 = vpow.pop %v1291
    %v1293 = vmul.f32 %v1270, 1.442695
    %v1294 = vpow.pop %v1293
    %v1295 = vmul.f32 %v1271, 1.442695
    %v1296 = vpow.pop %v1295
    %v1297 = vmul.f32 %v1272, 1.442695
    %v1298 = vpow.pop %v1297
    %v1299 = vmul.f32 %v1273, 1.442695
    %v1300 = vpow.pop %v1299
    %v1301 = vmul.f32 %v1274, 1.442695
    %v1302 = vpow.pop %v1301
    %v1303 = vmul.f32 %v1275, 1.442695
    %v1304 = vpow.pop %v1303
    %v1305 = vmul.f32 %v1276, 1.442695
    %v1306 = vpow.pop %v1305
    %v1307 = vmul.f32 %v1277, 1.442695
    %v1308 = vpow.pop %v1307
    %v1309 = vmul.f32 %v1278, 1.442695
    %v1310 = vpow.pop %v1309
    %1311 = vadd.xlane.f32.xlu0 %v1280
    %v1312 = vpop.xlane.xlu0 %1311
    %1313 = vadd.xlane.f32.xlu0 %v1282
    %v1314 = vpop.xlane.xlu0 %1313
    %1315 = vadd.xlane.f32.xlu0 %v1284
    %v1316 = vpop.xlane.xlu0 %1315
    %1317 = vadd.xlane.f32.xlu0 %v1286
    %v1318 = vpop.xlane.xlu0 %1317
    %1319 = vadd.xlane.f32.xlu0 %v1288
    %v1320 = vpop.xlane.xlu0 %1319
    %1321 = vadd.xlane.f32.xlu0 %v1290
    %v1322 = vpop.xlane.xlu0 %1321
    %1323 = vadd.xlane.f32.xlu0 %v1292
    %v1324 = vpop.xlane.xlu0 %1323
    %1325 = vadd.xlane.f32.xlu0 %v1294
    %v1326 = vpop.xlane.xlu0 %1325
    %1327 = vadd.xlane.f32.xlu0 %v1296
    %v1328 = vpop.xlane.xlu0 %1327
    %1329 = vadd.xlane.f32.xlu0 %v1298
    %v1330 = vpop.xlane.xlu0 %1329
    %1331 = vadd.xlane.f32.xlu0 %v1300
    %v1332 = vpop.xlane.xlu0 %1331
    %1333 = vadd.xlane.f32.xlu0 %v1302
    %v1334 = vpop.xlane.xlu0 %1333
    %1335 = vadd.xlane.f32.xlu0 %v1304
    %v1336 = vpop.xlane.xlu0 %1335
    %1337 = vadd.xlane.f32.xlu0 %v1306
    %v1338 = vpop.xlane.xlu0 %1337
    %1339 = vadd.xlane.f32.xlu0 %v1308
    %v1340 = vpop.xlane.xlu0 %1339
    %1341 = vadd.xlane.f32.xlu0 %v1310
    %v1342 = vpop.xlane.xlu0 %1341
    %v1343 = vrcp.pop %v1312
    %v1344 = vmul.f32 %v1280, %v1343
    %v1345 = vrcp.pop %v1314
    %v1346 = vmul.f32 %v1282, %v1345
    %v1347 = vrcp.pop %v1316
    %v1348 = vmul.f32 %v1284, %v1347
    %v1349 = vrcp.pop %v1318
    %v1350 = vmul.f32 %v1286, %v1349
    %v1351 = vrcp.pop %v1320
    %v1352 = vmul.f32 %v1288, %v1351
    %v1353 = vrcp.pop %v1322
    %v1354 = vmul.f32 %v1290, %v1353
    %v1355 = vrcp.pop %v1324
    %v1356 = vmul.f32 %v1292, %v1355
    %v1357 = vrcp.pop %v1326
    %v1358 = vmul.f32 %v1294, %v1357
    %v1359 = vrcp.pop %v1328
    %v1360 = vmul.f32 %v1296, %v1359
    %v1361 = vrcp.pop %v1330
    %v1362 = vmul.f32 %v1298, %v1361
    %v1363 = vrcp.pop %v1332
    %v1364 = vmul.f32 %v1300, %v1363
    %v1365 = vrcp.pop %v1334
    %v1366 = vmul.f32 %v1302, %v1365
    %v1367 = vrcp.pop %v1336
    %v1368 = vmul.f32 %v1304, %v1367
    %v1369 = vrcp.pop %v1338
    %v1370 = vmul.f32 %v1306, %v1369
    %v1371 = vrcp.pop %v1340
    %v1372 = vmul.f32 %v1308, %v1371
    %v1373 = vrcp.pop %v1342
    %v1374 = vmul.f32 %v1310, %v1373
    %v1375 = vmul.f32 %v1344, %v142
    %v1376 = vmul.f32 %v1346, %v143
    %v1377 = vmul.f32 %v1348, %v144
    %v1378 = vmul.f32 %v1350, %v145
    %v1379 = vmul.f32 %v1352, %v146
    %v1380 = vmul.f32 %v1354, %v147
    %v1381 = vmul.f32 %v1356, %v148
    %v1382 = vmul.f32 %v1358, %v149
    %v1383 = vmul.f32 %v1360, %v150
    %v1384 = vmul.f32 %v1362, %v151
    %v1385 = vmul.f32 %v1364, %v152
    %v1386 = vmul.f32 %v1366, %v153
    %v1387 = vmul.f32 %v1368, %v154
    %v1388 = vmul.f32 %v1370, %v155
    %v1389 = vmul.f32 %v1372, %v156
    %v1390 = vmul.f32 %v1374, %v157
    %v1391 = vpack.c.bf16 %v1376, %v1375
    %v1392 = vpack.c.bf16 %v1378, %v1377
    %v1393 = vpack.c.bf16 %v1380, %v1379
    %v1394 = vpack.c.bf16 %v1382, %v1381
    %v1395 = vpack.c.bf16 %v1384, %v1383
    %v1396 = vpack.c.bf16 %v1386, %v1385
    %v1397 = vpack.c.bf16 %v1388, %v1387
    %v1398 = vpack.c.bf16 %v1390, %v1389
    %1399 = vmatprep.subr.bf16.mxu0 0
    %1400 = vmatpush1.bf16.xpose.msra.mxu0 %v1398
    %1401 = vmatprep.subr.bf16.mxu0 0
    %1402 = vmatpush1.bf16.xpose.msra.mxu0 %v1397
    %1403 = vmatprep.subr.bf16.mxu0 0
    %1404 = vmatpush1.bf16.xpose.msra.mxu0 %v1396
    %1405 = vmatprep.subr.bf16.mxu0 0
    %1406 = vmatpush1.bf16.xpose.msra.mxu0 %v1395
    %1407 = vmatprep.subr.bf16.mxu0 0
    %1408 = vmatpush1.bf16.xpose.msra.mxu0 %v1394
    %1409 = vmatprep.subr.bf16.mxu0 0
    %1410 = vmatpush1.bf16.xpose.msra.mxu0 %v1393
    %1411 = vmatprep.subr.bf16.mxu0 0
    %1412 = vmatpush1.bf16.xpose.msra.mxu0 %v1392
    %1413 = vmatprep.subr.bf16.mxu0 0
    %1414 = vmatpush1.bf16.xpose.msra.mxu0 %v1391
    %1415 = vmatprep.subr.bf16.mxu0 0
    %1416 = vmatpush2.bf16.xpose.msra.mxu0 0
    %1417 = vmatprep.subr.bf16.mxu0 0
    %1418 = vmatpush2.bf16.xpose.msra.mxu0 0
    %1419 = vmatprep.subr.bf16.mxu0 0
    %1420 = vmatpush2.bf16.xpose.msra.mxu0 0
    %1421 = vmatprep.subr.bf16.mxu0 0
    %1422 = vmatpush2.bf16.xpose.msra.mxu0 0
    %1423 = vmatprep.subr.bf16.mxu0 0
    %1424 = vmatpush2.bf16.xpose.msra.mxu0 0
    %1425 = vmatprep.subr.bf16.mxu0 0
    %1426 = vmatpush2.bf16.xpose.msra.mxu0 0
    %1427 = vmatprep.subr.bf16.mxu0 0
    %1428 = vmatpush2.bf16.xpose.msra.mxu0 0
    %1429 = vmatprep.subr.bf16.mxu0 0
    %1430 = vmatpush2.bf16.xpose.msra.mxu0 0
    %1431 = vmatprep.mubr.bf16.mxu0 0
    %1432 = vmatmul.mubr.bf16.gmra.mxu0 %v1391
    %v1433 = vpop.f32.mrf.mxu0
    %v1434 = vadd.f32 0.0, %v1433
    %v1435 = vpop.f32.mrf.mxu0
    %v1436 = vpop.f32.mrf.mxu0
    %v1437 = vadd.f32 0.0, %v1436
    %v1438 = vpop.f32.mrf.mxu0
    %1439 = vmatprep.mubr.bf16.mxu0 0
    %1440 = vmatmul.mubr.bf16.gmra.mxu0 %v1392
    %v1441 = vpop.f32.mrf.mxu0
    %v1442 = vadd.f32 0.0, %v1441
    %v1443 = vpop.f32.mrf.mxu0
    %v1444 = vpop.f32.mrf.mxu0
    %v1445 = vadd.f32 0.0, %v1444
    %v1446 = vpop.f32.mrf.mxu0
    %1447 = vmatprep.mubr.bf16.mxu0 0
    %1448 = vmatmul.mubr.bf16.gmra.mxu0 %v1393
    %v1449 = vpop.f32.mrf.mxu0
    %v1450 = vadd.f32 0.0, %v1449
    %v1451 = vpop.f32.mrf.mxu0
    %v1452 = vpop.f32.mrf.mxu0
    %v1453 = vadd.f32 0.0, %v1452
    %v1454 = vpop.f32.mrf.mxu0
    %1455 = vmatprep.mubr.bf16.mxu0 0
    %1456 = vmatmul.mubr.bf16.gmra.mxu0 %v1394
    %v1457 = vpop.f32.mrf.mxu0
    %v1458 = vadd.f32 0.0, %v1457
    %v1459 = vpop.f32.mrf.mxu0
    %v1460 = vpop.f32.mrf.mxu0
    %v1461 = vadd.f32 0.0, %v1460
    %v1462 = vpop.f32.mrf.mxu0
    %1463 = vmatprep.mubr.bf16.mxu0 0
    %1464 = vmatmul.mubr.bf16.gmra.mxu0 %v1395
    %v1465 = vpop.f32.mrf.mxu0
    %v1466 = vadd.f32 0.0, %v1465
    %v1467 = vpop.f32.mrf.mxu0
    %v1468 = vpop.f32.mrf.mxu0
    %v1469 = vadd.f32 0.0, %v1468
    %v1470 = vpop.f32.mrf.mxu0
    %1471 = vmatprep.mubr.bf16.mxu0 0
    %1472 = vmatmul.mubr.bf16.gmra.mxu0 %v1396
    %v1473 = vpop.f32.mrf.mxu0
    %v1474 = vadd.f32 0.0, %v1473
    %v1475 = vpop.f32.mrf.mxu0
    %v1476 = vpop.f32.mrf.mxu0
    %v1477 = vadd.f32 0.0, %v1476
    %v1478 = vpop.f32.mrf.mxu0
    %1479 = vmatprep.mubr.bf16.mxu0 0
    %1480 = vmatmul.mubr.bf16.gmra.mxu0 %v1397
    %v1481 = vpop.f32.mrf.mxu0
    %v1482 = vadd.f32 0.0, %v1481
    %v1483 = vpop.f32.mrf.mxu0
    %v1484 = vpop.f32.mrf.mxu0
    %v1485 = vadd.f32 0.0, %v1484
    %v1486 = vpop.f32.mrf.mxu0
    %1487 = vmatprep.mubr.bf16.mxu0 0
    %1488 = vmatmul.mubr.bf16.gmra.mxu0 %v1398
    %v1489 = vpop.f32.mrf.mxu0
    %v1490 = vadd.f32 0.0, %v1489
    %v1491 = vpop.f32.mrf.mxu0
    %v1492 = vpop.f32.mrf.mxu0
    %v1493 = vadd.f32 0.0, %v1492
    %v1494 = vpop.f32.mrf.mxu0
    %1495 = vdwg.mxu0
    %v1496 = vpack.c.bf16 %v1437, %v1434
    %v1497 = vpack.c.bf16 %v1445, %v1442
    %v1498 = vpack.c.bf16 %v1453, %v1450
    %v1499 = vpack.c.bf16 %v1461, %v1458
    %v1500 = vpack.c.bf16 %v1469, %v1466
    %v1501 = vpack.c.bf16 %v1477, %v1474
    %v1502 = vpack.c.bf16 %v1485, %v1482
    %v1503 = vpack.c.bf16 %v1493, %v1490
    %v1504 = vpack.c.bf16 %v1049, %v1048
    %v1505 = vpack.c.bf16 %v1051, %v1050
    %v1506 = vpack.c.bf16 %v1053, %v1052
    %v1507 = vpack.c.bf16 %v1055, %v1054
    %v1508 = vpack.c.bf16 %v1057, %v1056
    %v1509 = vpack.c.bf16 %v1059, %v1058
    %v1510 = vpack.c.bf16 %v1061, %v1060
    %v1511 = vpack.c.bf16 %v1063, %v1062
    %1512 = vmatprep.subr.bf16.mxu0 0
    %1513 = vmatpush1.bf16.msra.mxu0 %v1511
    %1514 = vmatprep.subr.bf16.mxu0 0
    %1515 = vmatpush1.bf16.msra.mxu0 %v1510
    %1516 = vmatprep.subr.bf16.mxu0 0
    %1517 = vmatpush1.bf16.msra.mxu0 %v1509
    %1518 = vmatprep.subr.bf16.mxu0 0
    %1519 = vmatpush1.bf16.msra.mxu0 %v1508
    %1520 = vmatprep.subr.bf16.mxu0 0
    %1521 = vmatpush1.bf16.msra.mxu0 %v1507
    %1522 = vmatprep.subr.bf16.mxu0 0
    %1523 = vmatpush1.bf16.msra.mxu0 %v1506
    %1524 = vmatprep.subr.bf16.mxu0 0
    %1525 = vmatpush1.bf16.msra.mxu0 %v1505
    %1526 = vmatprep.subr.bf16.mxu0 0
    %1527 = vmatpush1.bf16.msra.mxu0 %v1504
    %1528 = vmatprep.subr.bf16.mxu0 0
    %1529 = vmatpush2.bf16.msra.mxu0 0
    %1530 = vmatprep.subr.bf16.mxu0 0
    %1531 = vmatpush2.bf16.msra.mxu0 0
    %1532 = vmatprep.subr.bf16.mxu0 0
    %1533 = vmatpush2.bf16.msra.mxu0 0
    %1534 = vmatprep.subr.bf16.mxu0 0
    %1535 = vmatpush2.bf16.msra.mxu0 0
    %1536 = vmatprep.subr.bf16.mxu0 0
    %1537 = vmatpush2.bf16.msra.mxu0 0
    %1538 = vmatprep.subr.bf16.mxu0 0
    %1539 = vmatpush2.bf16.msra.mxu0 0
    %1540 = vmatprep.subr.bf16.mxu0 0
    %1541 = vmatpush2.bf16.msra.mxu0 0
    %1542 = vmatprep.subr.bf16.mxu0 0
    %1543 = vmatpush2.bf16.msra.mxu0 0
    %1544 = vmatprep.mubr.bf16.mxu0 0
    %1545 = vmatmul.mubr.bf16.gmra.mxu0 %v1496
    %v1546 = vpop.f32.mrf.mxu0
    %v1547 = vadd.f32 0.0, %v1546
    %v1548 = vpop.f32.mrf.mxu0
    %v1549 = vpop.f32.mrf.mxu0
    %v1550 = vadd.f32 0.0, %v1549
    %v1551 = vpop.f32.mrf.mxu0
    %1552 = vmatprep.mubr.bf16.mxu0 0
    %1553 = vmatmul.mubr.bf16.gmra.mxu0 %v1497
    %v1554 = vpop.f32.mrf.mxu0
    %v1555 = vadd.f32 0.0, %v1554
    %v1556 = vpop.f32.mrf.mxu0
    %v1557 = vpop.f32.mrf.mxu0
    %v1558 = vadd.f32 0.0, %v1557
    %v1559 = vpop.f32.mrf.mxu0
    %1560 = vmatprep.mubr.bf16.mxu0 0
    %1561 = vmatmul.mubr.bf16.gmra.mxu0 %v1498
    %v1562 = vpop.f32.mrf.mxu0
    %v1563 = vadd.f32 0.0, %v1562
    %v1564 = vpop.f32.mrf.mxu0
    %v1565 = vpop.f32.mrf.mxu0
    %v1566 = vadd.f32 0.0, %v1565
    %v1567 = vpop.f32.mrf.mxu0
    %1568 = vmatprep.mubr.bf16.mxu0 0
    %1569 = vmatmul.mubr.bf16.gmra.mxu0 %v1499
    %v1570 = vpop.f32.mrf.mxu0
    %v1571 = vadd.f32 0.0, %v1570
    %v1572 = vpop.f32.mrf.mxu0
    %v1573 = vpop.f32.mrf.mxu0
    %v1574 = vadd.f32 0.0, %v1573
    %v1575 = vpop.f32.mrf.mxu0
    %1576 = vmatprep.mubr.bf16.mxu0 0
    %1577 = vmatmul.mubr.bf16.gmra.mxu0 %v1500
    %v1578 = vpop.f32.mrf.mxu0
    %v1579 = vadd.f32 0.0, %v1578
    %v1580 = vpop.f32.mrf.mxu0
    %v1581 = vpop.f32.mrf.mxu0
    %v1582 = vadd.f32 0.0, %v1581
    %v1583 = vpop.f32.mrf.mxu0
    %1584 = vmatprep.mubr.bf16.mxu0 0
    %1585 = vmatmul.mubr.bf16.gmra.mxu0 %v1501
    %v1586 = vpop.f32.mrf.mxu0
    %v1587 = vadd.f32 0.0, %v1586
    %v1588 = vpop.f32.mrf.mxu0
    %v1589 = vpop.f32.mrf.mxu0
    %v1590 = vadd.f32 0.0, %v1589
    %v1591 = vpop.f32.mrf.mxu0
    %1592 = vmatprep.mubr.bf16.mxu0 0
    %1593 = vmatmul.mubr.bf16.gmra.mxu0 %v1502
    %v1594 = vpop.f32.mrf.mxu0
    %v1595 = vadd.f32 0.0, %v1594
    %v1596 = vpop.f32.mrf.mxu0
    %v1597 = vpop.f32.mrf.mxu0
    %v1598 = vadd.f32 0.0, %v1597
    %v1599 = vpop.f32.mrf.mxu0
    %1600 = vmatprep.mubr.bf16.mxu0 0
    %1601 = vmatmul.mubr.bf16.gmra.mxu0 %v1503
    %v1602 = vpop.f32.mrf.mxu0
    %v1603 = vadd.f32 0.0, %v1602
    %v1604 = vpop.f32.mrf.mxu0
    %v1605 = vpop.f32.mrf.mxu0
    %v1606 = vadd.f32 0.0, %v1605
    %v1607 = vpop.f32.mrf.mxu0
    %1608 = vdwg.mxu0
    %v1609 = vmul.f32 %v1547, 0.3
    %v1610 = vmul.f32 %v1550, 0.3
    %v1611 = vmul.f32 %v1555, 0.3
    %v1612 = vmul.f32 %v1558, 0.3
    %v1613 = vmul.f32 %v1563, 0.3
    %v1614 = vmul.f32 %v1566, 0.3
    %v1615 = vmul.f32 %v1571, 0.3
    %v1616 = vmul.f32 %v1574, 0.3
    %v1617 = vmul.f32 %v1579, 0.3
    %v1618 = vmul.f32 %v1582, 0.3
    %v1619 = vmul.f32 %v1587, 0.3
    %v1620 = vmul.f32 %v1590, 0.3
    %v1621 = vmul.f32 %v1595, 0.3
    %v1622 = vmul.f32 %v1598, 0.3
    %v1623 = vmul.f32 %v1603, 0.3
    %v1624 = vmul.f32 %v1606, 0.3
    %v1625 = vmul.f32 %v1048, 0.7
    %v1626 = vmul.f32 %v1049, 0.7
    %v1627 = vmul.f32 %v1050, 0.7
    %v1628 = vmul.f32 %v1051, 0.7
    %v1629 = vmul.f32 %v1052, 0.7
    %v1630 = vmul.f32 %v1053, 0.7
    %v1631 = vmul.f32 %v1054, 0.7
    %v1632 = vmul.f32 %v1055, 0.7
    %v1633 = vmul.f32 %v1056, 0.7
    %v1634 = vmul.f32 %v1057, 0.7
    %v1635 = vmul.f32 %v1058, 0.7
    %v1636 = vmul.f32 %v1059, 0.7
    %v1637 = vmul.f32 %v1060, 0.7
    %v1638 = vmul.f32 %v1061, 0.7
    %v1639 = vmul.f32 %v1062, 0.7
    %v1640 = vmul.f32 %v1063, 0.7
    %v1641 = vadd.f32 %v1609, %v1625
    %v1642 = vadd.f32 %v1610, %v1626
    %v1643 = vadd.f32 %v1611, %v1627
    %v1644 = vadd.f32 %v1612, %v1628
    %v1645 = vadd.f32 %v1613, %v1629
    %v1646 = vadd.f32 %v1614, %v1630
    %v1647 = vadd.f32 %v1615, %v1631
    %v1648 = vadd.f32 %v1616, %v1632
    %v1649 = vadd.f32 %v1617, %v1633
    %v1650 = vadd.f32 %v1618, %v1634
    %v1651 = vadd.f32 %v1619, %v1635
    %v1652 = vadd.f32 %v1620, %v1636
    %v1653 = vadd.f32 %v1621, %v1637
    %v1654 = vadd.f32 %v1622, %v1638
    %v1655 = vadd.f32 %v1623, %v1639
    %v1656 = vadd.f32 %v1624, %v1640
    %1657 = vst [vmem:[#allocation11] sm:$0xff] %v1375
    %1658 = vst [vmem:[#allocation11 + $0x8] sm:$0xff] %v1376
    %1659 = vst [vmem:[#allocation11 + $0x10] sm:$0xff] %v1377
    %1660 = vst [vmem:[#allocation11 + $0x18] sm:$0xff] %v1378
    %1661 = vst [vmem:[#allocation11 + $0x20] sm:$0xff] %v1379
    %1662 = vst [vmem:[#allocation11 + $0x28] sm:$0xff] %v1380
    %1663 = vst [vmem:[#allocation11 + $0x30] sm:$0xff] %v1381
    %1664 = vst [vmem:[#allocation11 + $0x38] sm:$0xff] %v1382
    %1665 = vst [vmem:[#allocation11 + $0x40] sm:$0xff] %v1383
    %1666 = vst [vmem:[#allocation11 + $0x48] sm:$0xff] %v1384
    %1667 = vst [vmem:[#allocation11 + $0x50] sm:$0xff] %v1385
    %1668 = vst [vmem:[#allocation11 + $0x58] sm:$0xff] %v1386
    %1669 = vst [vmem:[#allocation11 + $0x60] sm:$0xff] %v1387
    %1670 = vst [vmem:[#allocation11 + $0x68] sm:$0xff] %v1388
    %1671 = vst [vmem:[#allocation11 + $0x70] sm:$0xff] %v1389
    %1672 = vst [vmem:[#allocation11 + $0x78] sm:$0xff] %v1390
    %v1673 = vpack.c.bf16 %v1642, %v1641
    %v1674 = vpack.c.bf16 %v1644, %v1643
    %v1675 = vpack.c.bf16 %v1646, %v1645
    %v1676 = vpack.c.bf16 %v1648, %v1647
    %v1677 = vpack.c.bf16 %v1650, %v1649
    %v1678 = vpack.c.bf16 %v1652, %v1651
    %v1679 = vpack.c.bf16 %v1654, %v1653
    %v1680 = vpack.c.bf16 %v1656, %v1655
    %1681 = vmatprep.subr.bf16.mxu0 0
    %1682 = vmatpush1.bf16.msra.mxu0 %v1680
    %1683 = vmatprep.subr.bf16.mxu0 0
    %1684 = vmatpush1.bf16.msra.mxu0 %v1679
    %1685 = vmatprep.subr.bf16.mxu0 0
    %1686 = vmatpush1.bf16.msra.mxu0 %v1678
    %1687 = vmatprep.subr.bf16.mxu0 0
    %1688 = vmatpush1.bf16.msra.mxu0 %v1677
    %1689 = vmatprep.subr.bf16.mxu0 0
    %1690 = vmatpush1.bf16.msra.mxu0 %v1676
    %1691 = vmatprep.subr.bf16.mxu0 0
    %1692 = vmatpush1.bf16.msra.mxu0 %v1675
    %1693 = vmatprep.subr.bf16.mxu0 0
    %1694 = vmatpush1.bf16.msra.mxu0 %v1674
    %1695 = vmatprep.subr.bf16.mxu0 0
    %1696 = vmatpush1.bf16.msra.mxu0 %v1673
    %1697 = vmatprep.subr.bf16.mxu0 0
    %1698 = vmatpush2.bf16.msra.mxu0 0
    %1699 = vmatprep.subr.bf16.mxu0 0
    %1700 = vmatpush2.bf16.msra.mxu0 0
    %1701 = vmatprep.subr.bf16.mxu0 0
    %1702 = vmatpush2.bf16.msra.mxu0 0
    %1703 = vmatprep.subr.bf16.mxu0 0
    %1704 = vmatpush2.bf16.msra.mxu0 0
    %1705 = vmatprep.subr.bf16.mxu0 0
    %1706 = vmatpush2.bf16.msra.mxu0 0
    %1707 = vmatprep.subr.bf16.mxu0 0
    %1708 = vmatpush2.bf16.msra.mxu0 0
    %1709 = vmatprep.subr.bf16.mxu0 0
    %1710 = vmatpush2.bf16.msra.mxu0 0
    %1711 = vmatprep.subr.bf16.mxu0 0
    %1712 = vmatpush2.bf16.msra.mxu0 0
    %1713 = vmatprep.mubr.bf16.mxu0 0
    %1714 = vmatmul.mubr.bf16.gmra.mxu0 %v432
    %v1715 = vpop.f32.mrf.mxu0
    %v1716 = vadd.f32 0.0, %v1715
    %v1717 = vpop.f32.mrf.mxu0
    %v1718 = vpop.f32.mrf.mxu0
    %v1719 = vadd.f32 0.0, %v1718
    %v1720 = vpop.f32.mrf.mxu0
    %1721 = vmatprep.mubr.bf16.mxu0 0
    %1722 = vmatmul.mubr.bf16.gmra.mxu0 %v433
    %v1723 = vpop.f32.mrf.mxu0
    %v1724 = vadd.f32 0.0, %v1723
    %v1725 = vpop.f32.mrf.mxu0
    %v1726 = vpop.f32.mrf.mxu0
    %v1727 = vadd.f32 0.0, %v1726
    %v1728 = vpop.f32.mrf.mxu0
    %1729 = vmatprep.mubr.bf16.mxu0 0
    %1730 = vmatmul.mubr.bf16.gmra.mxu0 %v434
    %v1731 = vpop.f32.mrf.mxu0
    %v1732 = vadd.f32 0.0, %v1731
    %v1733 = vpop.f32.mrf.mxu0
    %v1734 = vpop.f32.mrf.mxu0
    %v1735 = vadd.f32 0.0, %v1734
    %v1736 = vpop.f32.mrf.mxu0
    %1737 = vmatprep.mubr.bf16.mxu0 0
    %1738 = vmatmul.mubr.bf16.gmra.mxu0 %v435
    %v1739 = vpop.f32.mrf.mxu0
    %v1740 = vadd.f32 0.0, %v1739
    %v1741 = vpop.f32.mrf.mxu0
    %v1742 = vpop.f32.mrf.mxu0
    %v1743 = vadd.f32 0.0, %v1742
    %v1744 = vpop.f32.mrf.mxu0
    %1745 = vmatprep.mubr.bf16.mxu0 0
    %1746 = vmatmul.mubr.bf16.gmra.mxu0 %v436
    %v1747 = vpop.f32.mrf.mxu0
    %v1748 = vadd.f32 0.0, %v1747
    %v1749 = vpop.f32.mrf.mxu0
    %v1750 = vpop.f32.mrf.mxu0
    %v1751 = vadd.f32 0.0, %v1750
    %v1752 = vpop.f32.mrf.mxu0
    %1753 = vmatprep.mubr.bf16.mxu0 0
    %1754 = vmatmul.mubr.bf16.gmra.mxu0 %v437
    %v1755 = vpop.f32.mrf.mxu0
    %v1756 = vadd.f32 0.0, %v1755
    %v1757 = vpop.f32.mrf.mxu0
    %v1758 = vpop.f32.mrf.mxu0
    %v1759 = vadd.f32 0.0, %v1758
    %v1760 = vpop.f32.mrf.mxu0
    %1761 = vmatprep.mubr.bf16.mxu0 0
    %1762 = vmatmul.mubr.bf16.gmra.mxu0 %v438
    %v1763 = vpop.f32.mrf.mxu0
    %v1764 = vadd.f32 0.0, %v1763
    %v1765 = vpop.f32.mrf.mxu0
    %v1766 = vpop.f32.mrf.mxu0
    %v1767 = vadd.f32 0.0, %v1766
    %v1768 = vpop.f32.mrf.mxu0
    %1769 = vmatprep.mubr.bf16.mxu0 0
    %1770 = vmatmul.mubr.bf16.gmra.mxu0 %v439
    %v1771 = vpop.f32.mrf.mxu0
    %v1772 = vadd.f32 0.0, %v1771
    %v1773 = vpop.f32.mrf.mxu0
    %v1774 = vpop.f32.mrf.mxu0
    %v1775 = vadd.f32 0.0, %v1774
    %v1776 = vpop.f32.mrf.mxu0
    %1777 = vdwg.mxu0
    %s1778 = scalar_lea.vmem [#allocation7], 192
    %v1779 = vld [vmem:[%s1778] sm:$0xf]
    %v1780 = vld [vmem:[%s1778 + $0x4] sm:$0xf]
    %v1781 = vld [vmem:[%s1778 + $0x8] sm:$0xf]
    %v1782 = vld [vmem:[%s1778 + $0xc] sm:$0xf]
    %v1783 = vld [vmem:[%s1778 + $0x10] sm:$0xf]
    %v1784 = vld [vmem:[%s1778 + $0x14] sm:$0xf]
    %v1785 = vld [vmem:[%s1778 + $0x18] sm:$0xf]
    %v1786 = vld [vmem:[%s1778 + $0x1c] sm:$0xf]
    %v1787 = vld [vmem:[%s1778 + $0x20] sm:$0xf]
    %v1788 = vld [vmem:[%s1778 + $0x24] sm:$0xf]
    %v1789 = vld [vmem:[%s1778 + $0x28] sm:$0xf]
    %v1790 = vld [vmem:[%s1778 + $0x2c] sm:$0xf]
    %v1791 = vld [vmem:[%s1778 + $0x30] sm:$0xf]
    %v1792 = vld [vmem:[%s1778 + $0x34] sm:$0xf]
    %v1793 = vld [vmem:[%s1778 + $0x38] sm:$0xf]
    %v1794 = vld [vmem:[%s1778 + $0x3c] sm:$0xf]
    %v1795 = vpack.c.bf16 %v1719, %v1716
    %v1796 = vpack.c.bf16 %v1727, %v1724
    %v1797 = vpack.c.bf16 %v1735, %v1732
    %v1798 = vpack.c.bf16 %v1743, %v1740
    %v1799 = vpack.c.bf16 %v1751, %v1748
    %v1800 = vpack.c.bf16 %v1759, %v1756
    %v1801 = vpack.c.bf16 %v1767, %v1764
    %v1802 = vpack.c.bf16 %v1775, %v1772
    %v1803 = vld [vmem:[#allocation8 + $0x3] sm:$0x1]
    %v1804 = vlaneseq
    %v1805 = vshrl.u32 %v1804, 7
    %v1806 = vsub.s32 0, %v1805
    %v1807 = vrot.slane %v1803, %v1806
    %v1824 = vunpack.c.l.b16 %v1779
    %v1825 = vunpack.c.l.b16 %v1780
    %v1826 = vunpack.c.l.b16 %v1781
    %v1827 = vunpack.c.l.b16 %v1782
    %v1828 = vunpack.c.l.b16 %v1783
    %v1829 = vunpack.c.l.b16 %v1784
    %v1830 = vunpack.c.l.b16 %v1785
    %v1831 = vunpack.c.l.b16 %v1786
    %v1832 = vunpack.c.l.b16 %v1787
    %v1833 = vunpack.c.l.b16 %v1788
    %v1834 = vunpack.c.l.b16 %v1789
    %v1835 = vunpack.c.l.b16 %v1790
    %v1836 = vunpack.c.l.b16 %v1791
    %v1837 = vunpack.c.l.b16 %v1792
    %v1838 = vunpack.c.l.b16 %v1793
    %v1839 = vunpack.c.l.b16 %v1794
    %v1840 = vpack.c.b16 %v1825, %v1824
    %v1841 = vpack.c.b16 %v1827, %v1826
    %v1842 = vpack.c.b16 %v1829, %v1828
    %v1843 = vpack.c.b16 %v1831, %v1830
    %v1844 = vpack.c.b16 %v1833, %v1832
    %v1845 = vpack.c.b16 %v1835, %v1834
    %v1846 = vpack.c.b16 %v1837, %v1836
    %v1847 = vpack.c.b16 %v1839, %v1838
    %1856 = vmatprep.subr.bf16.mxu0 0
    %1857 = vmatpush1.bf16.msra.mxu0 %v1847
    %1858 = vmatprep.subr.bf16.mxu0 0
    %1859 = vmatpush1.bf16.msra.mxu0 %v1846
    %1860 = vmatprep.subr.bf16.mxu0 0
    %1861 = vmatpush1.bf16.msra.mxu0 %v1845
    %1862 = vmatprep.subr.bf16.mxu0 0
    %1863 = vmatpush1.bf16.msra.mxu0 %v1844
    %1864 = vmatprep.subr.bf16.mxu0 0
    %1865 = vmatpush1.bf16.msra.mxu0 %v1843
    %1866 = vmatprep.subr.bf16.mxu0 0
    %1867 = vmatpush1.bf16.msra.mxu0 %v1842
    %1868 = vmatprep.subr.bf16.mxu0 0
    %1869 = vmatpush1.bf16.msra.mxu0 %v1841
    %1870 = vmatprep.subr.bf16.mxu0 0
    %1871 = vmatpush1.bf16.msra.mxu0 %v1840
    %1872 = vmatprep.subr.bf16.mxu0 0
    %1873 = vmatpush2.bf16.msra.mxu0 0
    %1874 = vmatprep.subr.bf16.mxu0 0
    %1875 = vmatpush2.bf16.msra.mxu0 0
    %1876 = vmatprep.subr.bf16.mxu0 0
    %1877 = vmatpush2.bf16.msra.mxu0 0
    %1878 = vmatprep.subr.bf16.mxu0 0
    %1879 = vmatpush2.bf16.msra.mxu0 0
    %1880 = vmatprep.subr.bf16.mxu0 0
    %1881 = vmatpush2.bf16.msra.mxu0 0
    %1882 = vmatprep.subr.bf16.mxu0 0
    %1883 = vmatpush2.bf16.msra.mxu0 0
    %1884 = vmatprep.subr.bf16.mxu0 0
    %1885 = vmatpush2.bf16.msra.mxu0 0
    %1886 = vmatprep.subr.bf16.mxu0 0
    %1887 = vmatpush2.bf16.msra.mxu0 0
    %1888 = vmatprep.mubr.bf16.mxu0 0
    %1889 = vmatmul.mubr.bf16.gmra.mxu0 %v1795
    %v1890 = vpop.f32.mrf.mxu0
    %v1891 = vadd.f32 %v1807, %v1890
    %v1892 = vpop.f32.mrf.mxu0
    %v1893 = vpop.f32.mrf.mxu0
    %v1894 = vadd.f32 %v1807, %v1893
    %v1895 = vpop.f32.mrf.mxu0
    %1896 = vmatprep.mubr.bf16.mxu0 0
    %1897 = vmatmul.mubr.bf16.gmra.mxu0 %v1796
    %v1898 = vpop.f32.mrf.mxu0
    %v1899 = vadd.f32 %v1807, %v1898
    %v1900 = vpop.f32.mrf.mxu0
    %v1901 = vpop.f32.mrf.mxu0
    %v1902 = vadd.f32 %v1807, %v1901
    %v1903 = vpop.f32.mrf.mxu0
    %1904 = vmatprep.mubr.bf16.mxu0 0
    %1905 = vmatmul.mubr.bf16.gmra.mxu0 %v1797
    %v1906 = vpop.f32.mrf.mxu0
    %v1907 = vadd.f32 %v1807, %v1906
    %v1908 = vpop.f32.mrf.mxu0
    %v1909 = vpop.f32.mrf.mxu0
    %v1910 = vadd.f32 %v1807, %v1909
    %v1911 = vpop.f32.mrf.mxu0
    %1912 = vmatprep.mubr.bf16.mxu0 0
    %1913 = vmatmul.mubr.bf16.gmra.mxu0 %v1798
    %v1914 = vpop.f32.mrf.mxu0
    %v1915 = vadd.f32 %v1807, %v1914
    %v1916 = vpop.f32.mrf.mxu0
    %v1917 = vpop.f32.mrf.mxu0
    %v1918 = vadd.f32 %v1807, %v1917
    %v1919 = vpop.f32.mrf.mxu0
    %1920 = vmatprep.mubr.bf16.mxu0 0
    %1921 = vmatmul.mubr.bf16.gmra.mxu0 %v1799
    %v1922 = vpop.f32.mrf.mxu0
    %v1923 = vadd.f32 %v1807, %v1922
    %v1924 = vpop.f32.mrf.mxu0
    %v1925 = vpop.f32.mrf.mxu0
    %v1926 = vadd.f32 %v1807, %v1925
    %v1927 = vpop.f32.mrf.mxu0
    %1928 = vmatprep.mubr.bf16.mxu0 0
    %1929 = vmatmul.mubr.bf16.gmra.mxu0 %v1800
    %v1930 = vpop.f32.mrf.mxu0
    %v1931 = vadd.f32 %v1807, %v1930
    %v1932 = vpop.f32.mrf.mxu0
    %v1933 = vpop.f32.mrf.mxu0
    %v1934 = vadd.f32 %v1807, %v1933
    %v1935 = vpop.f32.mrf.mxu0
    %1936 = vmatprep.mubr.bf16.mxu0 0
    %1937 = vmatmul.mubr.bf16.gmra.mxu0 %v1801
    %v1938 = vpop.f32.mrf.mxu0
    %v1939 = vadd.f32 %v1807, %v1938
    %v1940 = vpop.f32.mrf.mxu0
    %v1941 = vpop.f32.mrf.mxu0
    %v1942 = vadd.f32 %v1807, %v1941
    %v1943 = vpop.f32.mrf.mxu0
    %1944 = vmatprep.mubr.bf16.mxu0 0
    %1945 = vmatmul.mubr.bf16.gmra.mxu0 %v1802
    %v1946 = vpop.f32.mrf.mxu0
    %v1947 = vadd.f32 %v1807, %v1946
    %v1948 = vpop.f32.mrf.mxu0
    %v1949 = vpop.f32.mrf.mxu0
    %v1950 = vadd.f32 %v1807, %v1949
    %v1951 = vpop.f32.mrf.mxu0
    %1952 = vdwg.mxu0
    %v1953 = vmax.f32 %v1891, 0.0
    %v1954 = vmax.f32 %v1894, 0.0
    %v1955 = vmax.f32 %v1899, 0.0
    %v1956 = vmax.f32 %v1902, 0.0
    %v1957 = vmax.f32 %v1907, 0.0
    %v1958 = vmax.f32 %v1910, 0.0
    %v1959 = vmax.f32 %v1915, 0.0
    %v1960 = vmax.f32 %v1918, 0.0
    %v1961 = vmax.f32 %v1923, 0.0
    %v1962 = vmax.f32 %v1926, 0.0
    %v1963 = vmax.f32 %v1931, 0.0
    %v1964 = vmax.f32 %v1934, 0.0
    %v1965 = vmax.f32 %v1939, 0.0
    %v1966 = vmax.f32 %v1942, 0.0
    %v1967 = vmax.f32 %v1947, 0.0
    %v1968 = vmax.f32 %v1950, 0.0
    %v1969 = vadd.f32 %v1953, %v1641
    %v1970 = vadd.f32 %v1954, %v1642
    %v1971 = vadd.f32 %v1955, %v1643
    %v1972 = vadd.f32 %v1956, %v1644
    %v1973 = vadd.f32 %v1957, %v1645
    %v1974 = vadd.f32 %v1958, %v1646
    %v1975 = vadd.f32 %v1959, %v1647
    %v1976 = vadd.f32 %v1960, %v1648
    %v1977 = vadd.f32 %v1961, %v1649
    %v1978 = vadd.f32 %v1962, %v1650
    %v1979 = vadd.f32 %v1963, %v1651
    %v1980 = vadd.f32 %v1964, %v1652
    %v1981 = vadd.f32 %v1965, %v1653
    %v1982 = vadd.f32 %v1966, %v1654
    %v1983 = vadd.f32 %v1967, %v1655
    %v1984 = vadd.f32 %v1968, %v1656
    %v1985 = vpack.c.bf16 %v1970, %v1969
    %v1986 = vpack.c.bf16 %v1972, %v1971
    %v1987 = vpack.c.bf16 %v1974, %v1973
    %v1988 = vpack.c.bf16 %v1976, %v1975
    %v1989 = vpack.c.bf16 %v1978, %v1977
    %v1990 = vpack.c.bf16 %v1980, %v1979
    %v1991 = vpack.c.bf16 %v1982, %v1981
    %v1992 = vpack.c.bf16 %v1984, %v1983
    %1993 = vmatprep.subr.bf16.mxu0 0
    %1994 = vmatpush1.bf16.msra.mxu0 %v1992
    %1995 = vmatprep.subr.bf16.mxu0 0
    %1996 = vmatpush1.bf16.msra.mxu0 %v1991
    %1997 = vmatprep.subr.bf16.mxu0 0
    %1998 = vmatpush1.bf16.msra.mxu0 %v1990
    %1999 = vmatprep.subr.bf16.mxu0 0
    %2000 = vmatpush1.bf16.msra.mxu0 %v1989
    %2001 = vmatprep.subr.bf16.mxu0 0
    %2002 = vmatpush1.bf16.msra.mxu0 %v1988
    %2003 = vmatprep.subr.bf16.mxu0 0
    %2004 = vmatpush1.bf16.msra.mxu0 %v1987
    %2005 = vmatprep.subr.bf16.mxu0 0
    %2006 = vmatpush1.bf16.msra.mxu0 %v1986
    %2007 = vmatprep.subr.bf16.mxu0 0
    %2008 = vmatpush1.bf16.msra.mxu0 %v1985
    %2009 = vmatprep.subr.bf16.mxu0 0
    %2010 = vmatpush2.bf16.msra.mxu0 0
    %2011 = vmatprep.subr.bf16.mxu0 0
    %2012 = vmatpush2.bf16.msra.mxu0 0
    %2013 = vmatprep.subr.bf16.mxu0 0
    %2014 = vmatpush2.bf16.msra.mxu0 0
    %2015 = vmatprep.subr.bf16.mxu0 0
    %2016 = vmatpush2.bf16.msra.mxu0 0
    %2017 = vmatprep.subr.bf16.mxu0 0
    %2018 = vmatpush2.bf16.msra.mxu0 0
    %2019 = vmatprep.subr.bf16.mxu0 0
    %2020 = vmatpush2.bf16.msra.mxu0 0
    %2021 = vmatprep.subr.bf16.mxu0 0
    %2022 = vmatpush2.bf16.msra.mxu0 0
    %2023 = vmatprep.subr.bf16.mxu0 0
    %2024 = vmatpush2.bf16.msra.mxu0 0
    %2025 = vmatprep.mubr.bf16.mxu0 0
    %2026 = vmatmul.mubr.bf16.gmra.mxu0 %v432
    %v2027 = vpop.f32.mrf.mxu0
    %v2028 = vadd.f32 0.0, %v2027
    %v2029 = vpop.f32.mrf.mxu0
    %v2030 = vpop.f32.mrf.mxu0
    %v2031 = vadd.f32 0.0, %v2030
    %v2032 = vpop.f32.mrf.mxu0
    %2033 = vmatprep.mubr.bf16.mxu0 0
    %2034 = vmatmul.mubr.bf16.gmra.mxu0 %v433
    %v2035 = vpop.f32.mrf.mxu0
    %v2036 = vadd.f32 0.0, %v2035
    %v2037 = vpop.f32.mrf.mxu0
    %v2038 = vpop.f32.mrf.mxu0
    %v2039 = vadd.f32 0.0, %v2038
    %v2040 = vpop.f32.mrf.mxu0
    %2041 = vmatprep.mubr.bf16.mxu0 0
    %2042 = vmatmul.mubr.bf16.gmra.mxu0 %v434
    %v2043 = vpop.f32.mrf.mxu0
    %v2044 = vadd.f32 0.0, %v2043
    %v2045 = vpop.f32.mrf.mxu0
    %v2046 = vpop.f32.mrf.mxu0
    %v2047 = vadd.f32 0.0, %v2046
    %v2048 = vpop.f32.mrf.mxu0
    %2049 = vmatprep.mubr.bf16.mxu0 0
    %2050 = vmatmul.mubr.bf16.gmra.mxu0 %v435
    %v2051 = vpop.f32.mrf.mxu0
    %v2052 = vadd.f32 0.0, %v2051
    %v2053 = vpop.f32.mrf.mxu0
    %v2054 = vpop.f32.mrf.mxu0
    %v2055 = vadd.f32 0.0, %v2054
    %v2056 = vpop.f32.mrf.mxu0
    %2057 = vmatprep.mubr.bf16.mxu0 0
    %2058 = vmatmul.mubr.bf16.gmra.mxu0 %v436
    %v2059 = vpop.f32.mrf.mxu0
    %v2060 = vadd.f32 0.0, %v2059
    %v2061 = vpop.f32.mrf.mxu0
    %v2062 = vpop.f32.mrf.mxu0
    %v2063 = vadd.f32 0.0, %v2062
    %v2064 = vpop.f32.mrf.mxu0
    %2065 = vmatprep.mubr.bf16.mxu0 0
    %2066 = vmatmul.mubr.bf16.gmra.mxu0 %v437
    %v2067 = vpop.f32.mrf.mxu0
    %v2068 = vadd.f32 0.0, %v2067
    %v2069 = vpop.f32.mrf.mxu0
    %v2070 = vpop.f32.mrf.mxu0
    %v2071 = vadd.f32 0.0, %v2070
    %v2072 = vpop.f32.mrf.mxu0
    %2073 = vmatprep.mubr.bf16.mxu0 0
    %2074 = vmatmul.mubr.bf16.gmra.mxu0 %v438
    %v2075 = vpop.f32.mrf.mxu0
    %v2076 = vadd.f32 0.0, %v2075
    %v2077 = vpop.f32.mrf.mxu0
    %v2078 = vpop.f32.mrf.mxu0
    %v2079 = vadd.f32 0.0, %v2078
    %v2080 = vpop.f32.mrf.mxu0
    %2081 = vmatprep.mubr.bf16.mxu0 0
    %2082 = vmatmul.mubr.bf16.gmra.mxu0 %v439
    %v2083 = vpop.f32.mrf.mxu0
    %v2084 = vadd.f32 0.0, %v2083
    %v2085 = vpop.f32.mrf.mxu0
    %v2086 = vpop.f32.mrf.mxu0
    %v2087 = vadd.f32 0.0, %v2086
    %v2088 = vpop.f32.mrf.mxu0
    %2089 = vdwg.mxu0
    %s2090 = scalar_lea.vmem [#allocation7], 256
    %v2091 = vld [vmem:[%s2090] sm:$0xf]
    %v2092 = vld [vmem:[%s2090 + $0x4] sm:$0xf]
    %v2093 = vld [vmem:[%s2090 + $0x8] sm:$0xf]
    %v2094 = vld [vmem:[%s2090 + $0xc] sm:$0xf]
    %v2095 = vld [vmem:[%s2090 + $0x10] sm:$0xf]
    %v2096 = vld [vmem:[%s2090 + $0x14] sm:$0xf]
    %v2097 = vld [vmem:[%s2090 + $0x18] sm:$0xf]
    %v2098 = vld [vmem:[%s2090 + $0x1c] sm:$0xf]
    %v2099 = vld [vmem:[%s2090 + $0x20] sm:$0xf]
    %v2100 = vld [vmem:[%s2090 + $0x24] sm:$0xf]
    %v2101 = vld [vmem:[%s2090 + $0x28] sm:$0xf]
    %v2102 = vld [vmem:[%s2090 + $0x2c] sm:$0xf]
    %v2103 = vld [vmem:[%s2090 + $0x30] sm:$0xf]
    %v2104 = vld [vmem:[%s2090 + $0x34] sm:$0xf]
    %v2105 = vld [vmem:[%s2090 + $0x38] sm:$0xf]
    %v2106 = vld [vmem:[%s2090 + $0x3c] sm:$0xf]
    %v2107 = vpack.c.bf16 %v2031, %v2028
    %v2108 = vpack.c.bf16 %v2039, %v2036
    %v2109 = vpack.c.bf16 %v2047, %v2044
    %v2110 = vpack.c.bf16 %v2055, %v2052
    %v2111 = vpack.c.bf16 %v2063, %v2060
    %v2112 = vpack.c.bf16 %v2071, %v2068
    %v2113 = vpack.c.bf16 %v2079, %v2076
    %v2114 = vpack.c.bf16 %v2087, %v2084
    %v2115 = vld [vmem:[#allocation8 + $0x4] sm:$0x1]
    %v2116 = vlaneseq
    %v2117 = vshrl.u32 %v2116, 7
    %v2118 = vsub.s32 0, %v2117
    %v2119 = vrot.slane %v2115, %v2118
    %v2136 = vunpack.c.l.b16 %v2091
    %v2137 = vunpack.c.l.b16 %v2092
    %v2138 = vunpack.c.l.b16 %v2093
    %v2139 = vunpack.c.l.b16 %v2094
    %v2140 = vunpack.c.l.b16 %v2095
    %v2141 = vunpack.c.l.b16 %v2096
    %v2142 = vunpack.c.l.b16 %v2097
    %v2143 = vunpack.c.l.b16 %v2098
    %v2144 = vunpack.c.l.b16 %v2099
    %v2145 = vunpack.c.l.b16 %v2100
    %v2146 = vunpack.c.l.b16 %v2101
    %v2147 = vunpack.c.l.b16 %v2102
    %v2148 = vunpack.c.l.b16 %v2103
    %v2149 = vunpack.c.l.b16 %v2104
    %v2150 = vunpack.c.l.b16 %v2105
    %v2151 = vunpack.c.l.b16 %v2106
    %v2152 = vpack.c.b16 %v2137, %v2136
    %v2153 = vpack.c.b16 %v2139, %v2138
    %v2154 = vpack.c.b16 %v2141, %v2140
    %v2155 = vpack.c.b16 %v2143, %v2142
    %v2156 = vpack.c.b16 %v2145, %v2144
    %v2157 = vpack.c.b16 %v2147, %v2146
    %v2158 = vpack.c.b16 %v2149, %v2148
    %v2159 = vpack.c.b16 %v2151, %v2150
    %2168 = vmatprep.subr.bf16.mxu0 0
    %2169 = vmatpush1.bf16.msra.mxu0 %v2159
    %2170 = vmatprep.subr.bf16.mxu0 0
    %2171 = vmatpush1.bf16.msra.mxu0 %v2158
    %2172 = vmatprep.subr.bf16.mxu0 0
    %2173 = vmatpush1.bf16.msra.mxu0 %v2157
    %2174 = vmatprep.subr.bf16.mxu0 0
    %2175 = vmatpush1.bf16.msra.mxu0 %v2156
    %2176 = vmatprep.subr.bf16.mxu0 0
    %2177 = vmatpush1.bf16.msra.mxu0 %v2155
    %2178 = vmatprep.subr.bf16.mxu0 0
    %2179 = vmatpush1.bf16.msra.mxu0 %v2154
    %2180 = vmatprep.subr.bf16.mxu0 0
    %2181 = vmatpush1.bf16.msra.mxu0 %v2153
    %2182 = vmatprep.subr.bf16.mxu0 0
    %2183 = vmatpush1.bf16.msra.mxu0 %v2152
    %2184 = vmatprep.subr.bf16.mxu0 0
    %2185 = vmatpush2.bf16.msra.mxu0 0
    %2186 = vmatprep.subr.bf16.mxu0 0
    %2187 = vmatpush2.bf16.msra.mxu0 0
    %2188 = vmatprep.subr.bf16.mxu0 0
    %2189 = vmatpush2.bf16.msra.mxu0 0
    %2190 = vmatprep.subr.bf16.mxu0 0
    %2191 = vmatpush2.bf16.msra.mxu0 0
    %2192 = vmatprep.subr.bf16.mxu0 0
    %2193 = vmatpush2.bf16.msra.mxu0 0
    %2194 = vmatprep.subr.bf16.mxu0 0
    %2195 = vmatpush2.bf16.msra.mxu0 0
    %2196 = vmatprep.subr.bf16.mxu0 0
    %2197 = vmatpush2.bf16.msra.mxu0 0
    %2198 = vmatprep.subr.bf16.mxu0 0
    %2199 = vmatpush2.bf16.msra.mxu0 0
    %2200 = vmatprep.mubr.bf16.mxu0 0
    %2201 = vmatmul.mubr.bf16.gmra.mxu0 %v2107
    %v2202 = vpop.f32.mrf.mxu0
    %v2203 = vadd.f32 %v2119, %v2202
    %v2204 = vpop.f32.mrf.mxu0
    %v2205 = vpop.f32.mrf.mxu0
    %v2206 = vadd.f32 %v2119, %v2205
    %v2207 = vpop.f32.mrf.mxu0
    %2208 = vmatprep.mubr.bf16.mxu0 0
    %2209 = vmatmul.mubr.bf16.gmra.mxu0 %v2108
    %v2210 = vpop.f32.mrf.mxu0
    %v2211 = vadd.f32 %v2119, %v2210
    %v2212 = vpop.f32.mrf.mxu0
    %v2213 = vpop.f32.mrf.mxu0
    %v2214 = vadd.f32 %v2119, %v2213
    %v2215 = vpop.f32.mrf.mxu0
    %2216 = vmatprep.mubr.bf16.mxu0 0
    %2217 = vmatmul.mubr.bf16.gmra.mxu0 %v2109
    %v2218 = vpop.f32.mrf.mxu0
    %v2219 = vadd.f32 %v2119, %v2218
    %v2220 = vpop.f32.mrf.mxu0
    %v2221 = vpop.f32.mrf.mxu0
    %v2222 = vadd.f32 %v2119, %v2221
    %v2223 = vpop.f32.mrf.mxu0
    %2224 = vmatprep.mubr.bf16.mxu0 0
    %2225 = vmatmul.mubr.bf16.gmra.mxu0 %v2110
    %v2226 = vpop.f32.mrf.mxu0
    %v2227 = vadd.f32 %v2119, %v2226
    %v2228 = vpop.f32.mrf.mxu0
    %v2229 = vpop.f32.mrf.mxu0
    %v2230 = vadd.f32 %v2119, %v2229
    %v2231 = vpop.f32.mrf.mxu0
    %2232 = vmatprep.mubr.bf16.mxu0 0
    %2233 = vmatmul.mubr.bf16.gmra.mxu0 %v2111
    %v2234 = vpop.f32.mrf.mxu0
    %v2235 = vadd.f32 %v2119, %v2234
    %v2236 = vpop.f32.mrf.mxu0
    %v2237 = vpop.f32.mrf.mxu0
    %v2238 = vadd.f32 %v2119, %v2237
    %v2239 = vpop.f32.mrf.mxu0
    %2240 = vmatprep.mubr.bf16.mxu0 0
    %2241 = vmatmul.mubr.bf16.gmra.mxu0 %v2112
    %v2242 = vpop.f32.mrf.mxu0
    %v2243 = vadd.f32 %v2119, %v2242
    %v2244 = vpop.f32.mrf.mxu0
    %v2245 = vpop.f32.mrf.mxu0
    %v2246 = vadd.f32 %v2119, %v2245
    %v2247 = vpop.f32.mrf.mxu0
    %2248 = vmatprep.mubr.bf16.mxu0 0
    %2249 = vmatmul.mubr.bf16.gmra.mxu0 %v2113
    %v2250 = vpop.f32.mrf.mxu0
    %v2251 = vadd.f32 %v2119, %v2250
    %v2252 = vpop.f32.mrf.mxu0
    %v2253 = vpop.f32.mrf.mxu0
    %v2254 = vadd.f32 %v2119, %v2253
    %v2255 = vpop.f32.mrf.mxu0
    %2256 = vmatprep.mubr.bf16.mxu0 0
    %2257 = vmatmul.mubr.bf16.gmra.mxu0 %v2114
    %v2258 = vpop.f32.mrf.mxu0
    %v2259 = vadd.f32 %v2119, %v2258
    %v2260 = vpop.f32.mrf.mxu0
    %v2261 = vpop.f32.mrf.mxu0
    %v2262 = vadd.f32 %v2119, %v2261
    %v2263 = vpop.f32.mrf.mxu0
    %2264 = vdwg.mxu0
    %v2265 = vmax.f32 %v2203, 0.0
    %v2266 = vmax.f32 %v2206, 0.0
    %v2267 = vmax.f32 %v2211, 0.0
    %v2268 = vmax.f32 %v2214, 0.0
    %v2269 = vmax.f32 %v2219, 0.0
    %v2270 = vmax.f32 %v2222, 0.0
    %v2271 = vmax.f32 %v2227, 0.0
    %v2272 = vmax.f32 %v2230, 0.0
    %v2273 = vmax.f32 %v2235, 0.0
    %v2274 = vmax.f32 %v2238, 0.0
    %v2275 = vmax.f32 %v2243, 0.0
    %v2276 = vmax.f32 %v2246, 0.0
    %v2277 = vmax.f32 %v2251, 0.0
    %v2278 = vmax.f32 %v2254, 0.0
    %v2279 = vmax.f32 %v2259, 0.0
    %v2280 = vmax.f32 %v2262, 0.0
    %v2281 = vadd.f32 %v2265, %v1969
    %v2282 = vadd.f32 %v2266, %v1970
    %v2283 = vadd.f32 %v2267, %v1971
    %v2284 = vadd.f32 %v2268, %v1972
    %v2285 = vadd.f32 %v2269, %v1973
    %v2286 = vadd.f32 %v2270, %v1974
    %v2287 = vadd.f32 %v2271, %v1975
    %v2288 = vadd.f32 %v2272, %v1976
    %v2289 = vadd.f32 %v2273, %v1977
    %v2290 = vadd.f32 %v2274, %v1978
    %v2291 = vadd.f32 %v2275, %v1979
    %v2292 = vadd.f32 %v2276, %v1980
    %v2293 = vadd.f32 %v2277, %v1981
    %v2294 = vadd.f32 %v2278, %v1982
    %v2295 = vadd.f32 %v2279, %v1983
    %v2296 = vadd.f32 %v2280, %v1984
    %v2297 = vpack.c.bf16 %v161, %v161
    %v2298 = vpack.c.bf16 %v2282, %v2281
    %v2299 = vpack.c.bf16 %v2284, %v2283
    %v2300 = vpack.c.bf16 %v2286, %v2285
    %v2301 = vpack.c.bf16 %v2288, %v2287
    %v2302 = vpack.c.bf16 %v2290, %v2289
    %v2303 = vpack.c.bf16 %v2292, %v2291
    %v2304 = vpack.c.bf16 %v2294, %v2293
    %v2305 = vpack.c.bf16 %v2296, %v2295
    %2306 = vmatprep.subr.bf16.mxu0 0
    %2307 = vmatpush1.bf16.msra.mxu0 %v2305
    %2308 = vmatprep.subr.bf16.mxu0 0
    %2309 = vmatpush1.bf16.msra.mxu0 %v2304
    %2310 = vmatprep.subr.bf16.mxu0 0
    %2311 = vmatpush1.bf16.msra.mxu0 %v2303
    %2312 = vmatprep.subr.bf16.mxu0 0
    %2313 = vmatpush1.bf16.msra.mxu0 %v2302
    %2314 = vmatprep.subr.bf16.mxu0 0
    %2315 = vmatpush1.bf16.msra.mxu0 %v2301
    %2316 = vmatprep.subr.bf16.mxu0 0
    %2317 = vmatpush1.bf16.msra.mxu0 %v2300
    %2318 = vmatprep.subr.bf16.mxu0 0
    %2319 = vmatpush1.bf16.msra.mxu0 %v2299
    %2320 = vmatprep.subr.bf16.mxu0 0
    %2321 = vmatpush1.bf16.msra.mxu0 %v2298
    %2322 = vmatprep.subr.bf16.mxu0 0
    %2323 = vmatpush2.bf16.msra.mxu0 0
    %2324 = vmatprep.subr.bf16.mxu0 0
    %2325 = vmatpush2.bf16.msra.mxu0 0
    %2326 = vmatprep.subr.bf16.mxu0 0
    %2327 = vmatpush2.bf16.msra.mxu0 0
    %2328 = vmatprep.subr.bf16.mxu0 0
    %2329 = vmatpush2.bf16.msra.mxu0 0
    %2330 = vmatprep.subr.bf16.mxu0 0
    %2331 = vmatpush2.bf16.msra.mxu0 0
    %2332 = vmatprep.subr.bf16.mxu0 0
    %2333 = vmatpush2.bf16.msra.mxu0 0
    %2334 = vmatprep.subr.bf16.mxu0 0
    %2335 = vmatpush2.bf16.msra.mxu0 0
    %2336 = vmatprep.subr.bf16.mxu0 0
    %2337 = vmatpush2.bf16.msra.mxu0 0
    %2338 = vmatprep.mubr.bf16.mxu0 0
    %2339 = vmatmul.mubr.bf16.gmra.mxu0 %v2297
    %v2340 = vpop.f32.mrf.mxu0
    %v2341 = vadd.f32 0.0, %v2340
    %v2342 = vpop.f32.mrf.mxu0
    %v2343 = vpop.f32.mrf.mxu0
    %v2344 = vpop.f32.mrf.mxu0
    %2345 = vdwg.mxu0
    %s2346 = scalar_lea.vmem [#allocation7], 384
    %v2347 = vld [vmem:[%s2346] sm:$0xf]
    %v2348 = vld [vmem:[%s2346 + $0x4] sm:$0xf]
    %v2349 = vld [vmem:[%s2346 + $0x8] sm:$0xf]
    %v2350 = vld [vmem:[%s2346 + $0xc] sm:$0xf]
    %v2351 = vld [vmem:[%s2346 + $0x10] sm:$0xf]
    %v2352 = vld [vmem:[%s2346 + $0x14] sm:$0xf]
    %v2353 = vld [vmem:[%s2346 + $0x18] sm:$0xf]
    %v2354 = vld [vmem:[%s2346 + $0x1c] sm:$0xf]
    %v2355 = vld [vmem:[%s2346 + $0x20] sm:$0xf]
    %v2356 = vld [vmem:[%s2346 + $0x24] sm:$0xf]
    %v2357 = vld [vmem:[%s2346 + $0x28] sm:$0xf]
    %v2358 = vld [vmem:[%s2346 + $0x2c] sm:$0xf]
    %v2359 = vld [vmem:[%s2346 + $0x30] sm:$0xf]
    %v2360 = vld [vmem:[%s2346 + $0x34] sm:$0xf]
    %v2361 = vld [vmem:[%s2346 + $0x38] sm:$0xf]
    %v2362 = vld [vmem:[%s2346 + $0x3c] sm:$0xf]
    %v2363 = vpack.c.bf16 %v2341, %v2341
    %v2364 = vld [vmem:[#allocation8 + $0x6] sm:$0x1]
    %v2381 = vunpack.c.l.b16 %v2347
    %v2382 = vunpack.c.l.b16 %v2348
    %v2383 = vunpack.c.l.b16 %v2349
    %v2384 = vunpack.c.l.b16 %v2350
    %v2385 = vunpack.c.l.b16 %v2351
    %v2386 = vunpack.c.l.b16 %v2352
    %v2387 = vunpack.c.l.b16 %v2353
    %v2388 = vunpack.c.l.b16 %v2354
    %v2389 = vunpack.c.l.b16 %v2355
    %v2390 = vunpack.c.l.b16 %v2356
    %v2391 = vunpack.c.l.b16 %v2357
    %v2392 = vunpack.c.l.b16 %v2358
    %v2393 = vunpack.c.l.b16 %v2359
    %v2394 = vunpack.c.l.b16 %v2360
    %v2395 = vunpack.c.l.b16 %v2361
    %v2396 = vunpack.c.l.b16 %v2362
    %v2397 = vpack.c.b16 %v2382, %v2381
    %v2398 = vpack.c.b16 %v2384, %v2383
    %v2399 = vpack.c.b16 %v2386, %v2385
    %v2400 = vpack.c.b16 %v2388, %v2387
    %v2401 = vpack.c.b16 %v2390, %v2389
    %v2402 = vpack.c.b16 %v2392, %v2391
    %v2403 = vpack.c.b16 %v2394, %v2393
    %v2404 = vpack.c.b16 %v2396, %v2395
    %2413 = vmatprep.subr.bf16.mxu0 0
    %2414 = vmatpush1.bf16.msra.mxu0 %v2404
    %2415 = vmatprep.subr.bf16.mxu0 0
    %2416 = vmatpush1.bf16.msra.mxu0 %v2403
    %2417 = vmatprep.subr.bf16.mxu0 0
    %2418 = vmatpush1.bf16.msra.mxu0 %v2402
    %2419 = vmatprep.subr.bf16.mxu0 0
    %2420 = vmatpush1.bf16.msra.mxu0 %v2401
    %2421 = vmatprep.subr.bf16.mxu0 0
    %2422 = vmatpush1.bf16.msra.mxu0 %v2400
    %2423 = vmatprep.subr.bf16.mxu0 0
    %2424 = vmatpush1.bf16.msra.mxu0 %v2399
    %2425 = vmatprep.subr.bf16.mxu0 0
    %2426 = vmatpush1.bf16.msra.mxu0 %v2398
    %2427 = vmatprep.subr.bf16.mxu0 0
    %2428 = vmatpush1.bf16.msra.mxu0 %v2397
    %2429 = vmatprep.subr.bf16.mxu0 0
    %2430 = vmatpush2.bf16.msra.mxu0 0
    %2431 = vmatprep.subr.bf16.mxu0 0
    %2432 = vmatpush2.bf16.msra.mxu0 0
    %2433 = vmatprep.subr.bf16.mxu0 0
    %2434 = vmatpush2.bf16.msra.mxu0 0
    %2435 = vmatprep.subr.bf16.mxu0 0
    %2436 = vmatpush2.bf16.msra.mxu0 0
    %2437 = vmatprep.subr.bf16.mxu0 0
    %2438 = vmatpush2.bf16.msra.mxu0 0
    %2439 = vmatprep.subr.bf16.mxu0 0
    %2440 = vmatpush2.bf16.msra.mxu0 0
    %2441 = vmatprep.subr.bf16.mxu0 0
    %2442 = vmatpush2.bf16.msra.mxu0 0
    %2443 = vmatprep.subr.bf16.mxu0 0
    %2444 = vmatpush2.bf16.msra.mxu0 0
    %2445 = vmatprep.mubr.bf16.mxu0 0
    %2446 = vmatmul.mubr.bf16.gmra.mxu0 %v2363
    %v2447 = vpop.f32.mrf.mxu0
    %v2448 = vadd.f32 %v2364, %v2447
    %v2449 = vpop.f32.mrf.mxu0
    %v2450 = vpop.f32.mrf.mxu0
    %v2451 = vpop.f32.mrf.mxu0
    %2452 = vdwg.mxu0
    %v2453 = vmax.f32 %v2448, 0.0
    %s2454 = scalar_lea.vmem [#allocation7], 448
    %v2455 = vld [vmem:[%s2454] sm:$0xf]
    %v2456 = vld [vmem:[%s2454 + $0x4] sm:$0xf]
    %v2457 = vld [vmem:[%s2454 + $0x8] sm:$0xf]
    %v2458 = vld [vmem:[%s2454 + $0xc] sm:$0xf]
    %v2459 = vld [vmem:[%s2454 + $0x10] sm:$0xf]
    %v2460 = vld [vmem:[%s2454 + $0x14] sm:$0xf]
    %v2461 = vld [vmem:[%s2454 + $0x18] sm:$0xf]
    %v2462 = vld [vmem:[%s2454 + $0x1c] sm:$0xf]
    %v2463 = vld [vmem:[%s2454 + $0x20] sm:$0xf]
    %v2464 = vld [vmem:[%s2454 + $0x24] sm:$0xf]
    %v2465 = vld [vmem:[%s2454 + $0x28] sm:$0xf]
    %v2466 = vld [vmem:[%s2454 + $0x2c] sm:$0xf]
    %v2467 = vld [vmem:[%s2454 + $0x30] sm:$0xf]
    %v2468 = vld [vmem:[%s2454 + $0x34] sm:$0xf]
    %v2469 = vld [vmem:[%s2454 + $0x38] sm:$0xf]
    %v2470 = vld [vmem:[%s2454 + $0x3c] sm:$0xf]
    %v2471 = vpack.c.bf16 %v2453, %v2453
    %v2472 = vld [vmem:[#allocation8 + $0x7] sm:$0x1]
    %v2489 = vunpack.c.l.b16 %v2455
    %v2490 = vunpack.c.l.b16 %v2456
    %v2491 = vunpack.c.l.b16 %v2457
    %v2492 = vunpack.c.l.b16 %v2458
    %v2493 = vunpack.c.l.b16 %v2459
    %v2494 = vunpack.c.l.b16 %v2460
    %v2495 = vunpack.c.l.b16 %v2461
    %v2496 = vunpack.c.l.b16 %v2462
    %v2497 = vunpack.c.l.b16 %v2463
    %v2498 = vunpack.c.l.b16 %v2464
    %v2499 = vunpack.c.l.b16 %v2465
    %v2500 = vunpack.c.l.b16 %v2466
    %v2501 = vunpack.c.l.b16 %v2467
    %v2502 = vunpack.c.l.b16 %v2468
    %v2503 = vunpack.c.l.b16 %v2469
    %v2504 = vunpack.c.l.b16 %v2470
    %v2505 = vpack.c.b16 %v2490, %v2489
    %v2506 = vpack.c.b16 %v2492, %v2491
    %v2507 = vpack.c.b16 %v2494, %v2493
    %v2508 = vpack.c.b16 %v2496, %v2495
    %v2509 = vpack.c.b16 %v2498, %v2497
    %v2510 = vpack.c.b16 %v2500, %v2499
    %v2511 = vpack.c.b16 %v2502, %v2501
    %v2512 = vpack.c.b16 %v2504, %v2503
    %2521 = vmatprep.subr.bf16.mxu0 0
    %2522 = vmatpush1.bf16.msra.mxu0 %v2512
    %2523 = vmatprep.subr.bf16.mxu0 0
    %2524 = vmatpush1.bf16.msra.mxu0 %v2511
    %2525 = vmatprep.subr.bf16.mxu0 0
    %2526 = vmatpush1.bf16.msra.mxu0 %v2510
    %2527 = vmatprep.subr.bf16.mxu0 0
    %2528 = vmatpush1.bf16.msra.mxu0 %v2509
    %2529 = vmatprep.subr.bf16.mxu0 0
    %2530 = vmatpush1.bf16.msra.mxu0 %v2508
    %2531 = vmatprep.subr.bf16.mxu0 0
    %2532 = vmatpush1.bf16.msra.mxu0 %v2507
    %2533 = vmatprep.subr.bf16.mxu0 0
    %2534 = vmatpush1.bf16.msra.mxu0 %v2506
    %2535 = vmatprep.subr.bf16.mxu0 0
    %2536 = vmatpush1.bf16.msra.mxu0 %v2505
    %2537 = vmatprep.subr.bf16.mxu0 0
    %2538 = vmatpush2.bf16.msra.mxu0 0
    %2539 = vmatprep.subr.bf16.mxu0 0
    %2540 = vmatpush2.bf16.msra.mxu0 0
    %2541 = vmatprep.subr.bf16.mxu0 0
    %2542 = vmatpush2.bf16.msra.mxu0 0
    %2543 = vmatprep.subr.bf16.mxu0 0
    %2544 = vmatpush2.bf16.msra.mxu0 0
    %2545 = vmatprep.subr.bf16.mxu0 0
    %2546 = vmatpush2.bf16.msra.mxu0 0
    %2547 = vmatprep.subr.bf16.mxu0 0
    %2548 = vmatpush2.bf16.msra.mxu0 0
    %2549 = vmatprep.subr.bf16.mxu0 0
    %2550 = vmatpush2.bf16.msra.mxu0 0
    %2551 = vmatprep.subr.bf16.mxu0 0
    %2552 = vmatpush2.bf16.msra.mxu0 0
    %2553 = vmatprep.mubr.bf16.mxu0 0
    %2554 = vmatmul.mubr.bf16.gmra.mxu0 %v2471
    %v2555 = vpop.f32.mrf.mxu0
    %v2556 = vadd.f32 %v2472, %v2555
    %v2557 = vpop.f32.mrf.mxu0
    %v2558 = vpop.f32.mrf.mxu0
    %v2559 = vpop.f32.mrf.mxu0
    %2560 = vdwg.mxu0
    %v2561 = vmax.f32 %v2556, 0.0
    %s2562 = scalar_lea.vmem [#allocation7], 512
    %v2563 = vld [vmem:[%s2562] sm:$0xf]
    %v2564 = vld [vmem:[%s2562 + $0x4] sm:$0xf]
    %v2565 = vld [vmem:[%s2562 + $0x8] sm:$0xf]
    %v2566 = vld [vmem:[%s2562 + $0xc] sm:$0xf]
    %v2567 = vld [vmem:[%s2562 + $0x10] sm:$0xf]
    %v2568 = vld [vmem:[%s2562 + $0x14] sm:$0xf]
    %v2569 = vld [vmem:[%s2562 + $0x18] sm:$0xf]
    %v2570 = vld [vmem:[%s2562 + $0x1c] sm:$0xf]
    %v2571 = vld [vmem:[%s2562 + $0x20] sm:$0xf]
    %v2572 = vld [vmem:[%s2562 + $0x24] sm:$0xf]
    %v2573 = vld [vmem:[%s2562 + $0x28] sm:$0xf]
    %v2574 = vld [vmem:[%s2562 + $0x2c] sm:$0xf]
    %v2575 = vld [vmem:[%s2562 + $0x30] sm:$0xf]
    %v2576 = vld [vmem:[%s2562 + $0x34] sm:$0xf]
    %v2577 = vld [vmem:[%s2562 + $0x38] sm:$0xf]
    %v2578 = vld [vmem:[%s2562 + $0x3c] sm:$0xf]
    %v2579 = vpack.c.bf16 %v2561, %v2561
    %v2580 = vld [vmem:[#allocation8 + $0x8] sm:$0x1]
    %v2597 = vunpack.c.l.b16 %v2563
    %v2598 = vunpack.c.l.b16 %v2564
    %v2599 = vunpack.c.l.b16 %v2565
    %v2600 = vunpack.c.l.b16 %v2566
    %v2601 = vunpack.c.l.b16 %v2567
    %v2602 = vunpack.c.l.b16 %v2568
    %v2603 = vunpack.c.l.b16 %v2569
    %v2604 = vunpack.c.l.b16 %v2570
    %v2605 = vunpack.c.l.b16 %v2571
    %v2606 = vunpack.c.l.b16 %v2572
    %v2607 = vunpack.c.l.b16 %v2573
    %v2608 = vunpack.c.l.b16 %v2574
    %v2609 = vunpack.c.l.b16 %v2575
    %v2610 = vunpack.c.l.b16 %v2576
    %v2611 = vunpack.c.l.b16 %v2577
    %v2612 = vunpack.c.l.b16 %v2578
    %v2613 = vpack.c.b16 %v2598, %v2597
    %v2614 = vpack.c.b16 %v2600, %v2599
    %v2615 = vpack.c.b16 %v2602, %v2601
    %v2616 = vpack.c.b16 %v2604, %v2603
    %v2617 = vpack.c.b16 %v2606, %v2605
    %v2618 = vpack.c.b16 %v2608, %v2607
    %v2619 = vpack.c.b16 %v2610, %v2609
    %v2620 = vpack.c.b16 %v2612, %v2611
    %2629 = vmatprep.subr.bf16.mxu0 0
    %2630 = vmatpush1.bf16.msra.mxu0 %v2620
    %2631 = vmatprep.subr.bf16.mxu0 0
    %2632 = vmatpush1.bf16.msra.mxu0 %v2619
    %2633 = vmatprep.subr.bf16.mxu0 0
    %2634 = vmatpush1.bf16.msra.mxu0 %v2618
    %2635 = vmatprep.subr.bf16.mxu0 0
    %2636 = vmatpush1.bf16.msra.mxu0 %v2617
    %2637 = vmatprep.subr.bf16.mxu0 0
    %2638 = vmatpush1.bf16.msra.mxu0 %v2616
    %2639 = vmatprep.subr.bf16.mxu0 0
    %2640 = vmatpush1.bf16.msra.mxu0 %v2615
    %2641 = vmatprep.subr.bf16.mxu0 0
    %2642 = vmatpush1.bf16.msra.mxu0 %v2614
    %2643 = vmatprep.subr.bf16.mxu0 0
    %2644 = vmatpush1.bf16.msra.mxu0 %v2613
    %2645 = vmatprep.subr.bf16.mxu0 0
    %2646 = vmatpush2.bf16.msra.mxu0 0
    %2647 = vmatprep.subr.bf16.mxu0 0
    %2648 = vmatpush2.bf16.msra.mxu0 0
    %2649 = vmatprep.subr.bf16.mxu0 0
    %2650 = vmatpush2.bf16.msra.mxu0 0
    %2651 = vmatprep.subr.bf16.mxu0 0
    %2652 = vmatpush2.bf16.msra.mxu0 0
    %2653 = vmatprep.subr.bf16.mxu0 0
    %2654 = vmatpush2.bf16.msra.mxu0 0
    %2655 = vmatprep.subr.bf16.mxu0 0
    %2656 = vmatpush2.bf16.msra.mxu0 0
    %2657 = vmatprep.subr.bf16.mxu0 0
    %2658 = vmatpush2.bf16.msra.mxu0 0
    %2659 = vmatprep.subr.bf16.mxu0 0
    %2660 = vmatpush2.bf16.msra.mxu0 0
    %2661 = vmatprep.mubr.bf16.mxu0 0
    %2662 = vmatmul.mubr.bf16.gmra.mxu0 %v2579
    %v2663 = vpop.f32.mrf.mxu0
    %v2664 = vadd.f32 %v2580, %v2663
    %v2665 = vpop.f32.mrf.mxu0
    %v2666 = vpop.f32.mrf.mxu0
    %v2667 = vpop.f32.mrf.mxu0
    %2668 = vdwg.mxu0
    %2669 = vst [vmem:[#allocation10] sm:$0x1] %v2664
    // Predicated region
    $region34: #{tpu_custom_call.1} parent=1 // pred_check
      _
    $region35: #{tpu_custom_call.1} parent=1 // pred_check_branch
      %2671 = sbr.rel (0) target = $region37
    $region36: #{tpu_custom_call.1} parent=1 // pred_region
      %s2673 = ssub.s32 16, 16
      %2674 = vsyncadd [#allocation4], %s2673
      %s2676 = sshll.u32 [#allocation10], 4
      %s2677 = int_to_ptr.vmem [resolvable:$true] %s2676
      %2679 = dma.vmem_to_hbm [thread:$0]  %s2677, 16, %s4, [#allocation4]
    $region37: #{tpu_custom_call.1} parent=1 // pred_fallthru
      _
    // Predicated region
    $region38: #{tpu_custom_call.1} parent=1 // pred_check
      _
    $region39: #{tpu_custom_call.1} parent=1 // pred_check_branch
      %2681 = sbr.rel (0) target = $region41
    $region40: #{tpu_custom_call.1} parent=1 // pred_region
      %s2683 = ssub.s32 2048, 2048
      %2684 = vsyncadd [#allocation12], %s2683
      %s2685 = sshll.u32 [#allocation11], 4
      %s2686 = int_to_ptr.vmem [resolvable:$true] %s2685
      %2691 = dma.vmem_to_hbm [thread:$0]  %s2686, 2048, %s5, [#allocation12], 128, 128, 8
    $region41: #{tpu_custom_call.1} parent=1 // pred_fallthru
      _
    // Predicated region
    $region42: #{tpu_custom_call.1} parent=1 // pred_check
      _
    $region43: #{tpu_custom_call.1} parent=1 // pred_check_branch
      %2693 = sbr.rel (0) target = $region45
    $region44: #{tpu_custom_call.1} parent=1 // pred_region
      %2694 = dma.done [#allocation4], 16
    $region45: #{tpu_custom_call.1} parent=1 // pred_fallthru
      _
    // Predicated region
    $region46: #{tpu_custom_call.1} parent=1 // pred_check
      _
    $region47: #{tpu_custom_call.1} parent=1 // pred_check_branch
      %2696 = sbr.rel (0) target = $region49
    $region48: #{tpu_custom_call.1} parent=1 // pred_region
      %2697 = dma.done [#allocation12], 2048
    $region49: #{tpu_custom_call.1} parent=1 // pred_fallthru
      _
    %2698 = vsyncpa [#allocation3], 1
    %2699 = vsyncpa [#allocation6], 1
    %2700 = vsyncpa [#allocation9], 1
    %2701 = vsyncpa [#allocation4], 1
    %2702 = vsyncpa [#allocation12], 1

</llo_original>
